<compile_context>
chip_gen: v7x
topology: tpu7x:2x2x1
jax: 0.10.0
libtpu: 0.0.40
codegen_flags: <defaults>
</compile_context>

<pallas_src>
import functools

import jax
import jax.numpy as jnp
from jax.experimental import pallas as pl
from jax.experimental.pallas import tpu as pltpu

K = 5            # spectral conv kernel size (module hard-codes k=5)
PX = 2           # horizontal padding        (module hard-codes p=2)
LEAKY_SLOPE = 0.01
BN_EPS = 1e-5


def _leaky(v):
    # LeakyReLU as mul + max (one fewer VALU op than cmp + select).
    return jnp.maximum(v, LEAKY_SLOPE * v)


def _shift_lanes(v, offset):
    """out[..., p] = v[..., p + offset] along the last (lane) axis, zero-filled
    at the array ends.  `offset` is a static Python int.  The zero fill gives
    exact zero padding for vertical taps (offset = dh*W); horizontal taps get
    their intra-row validity from the mask pre-folded into the weight plane."""
    if offset == 0:
        return v
    L = v.shape[-1]
    if abs(offset) >= L:
        return jnp.zeros_like(v)
    pad = jnp.zeros(v.shape[:-1] + (abs(offset),), v.dtype)
    if offset > 0:
        return jnp.concatenate([v[..., offset:], pad], axis=-1)
    return jnp.concatenate([pad, v[..., :L + offset]], axis=-1)


def _residual_block_kernel(x_ref, wy_ref, wx_ref, pc_ref, o_ref, *, dil, py, w):
    """Single-invocation kernel; the whole (small) problem lives in VMEM.

    x_ref : (N, C, HW)        input activations, lane axis = flattened (H, W)
    wy_ref: (2*K*Cin, Cout, HW)  channel-mixing (ydim) weight planes per
                                 (stage, tap, cin), lane-dense (constant on HW)
    wx_ref: (2*K, C, HW)      depthwise (xdim) weight planes per (stage, tap)
                                 with the horizontal border mask folded in
    pc_ref: (2*4, C, 1)       per-channel [1x1 weight, 1x1 bias, bn gamma, bn beta]
    o_ref : (N, C, HW)        output
    """
    N, C, HW = x_ref.shape

    dh_list = [t * dil - py for t in range(K)]     # vertical tap offsets (rows)
    dw_list = [t - PX for t in range(K)]           # horizontal tap offsets (cols)
    inv_cnt = 1.0 / float(N * HW)                  # BN reduces over (N, H, W)

    x = x_ref[...]
    cur = x

    for i in range(2):     # two (SpectralConv2d -> BatchNorm2d) stages
        # ---- ydim: channel-mixing conv along H (k=K, dilation=dil, pad=py).
        # C is tiny -> K*Cin unrolled VPU broadcast MACs; MXU intentionally
        # NOT used (a 4x4 contraction would waste the systolic array).
        acc = jnp.zeros((N, C, HW), jnp.float32)
        for t in range(K):
            tap = _shift_lanes(cur, dh_list[t] * w)          # (N, C, HW), zero-padded rows
            for ci in range(C):
                # (Cout, HW) weight plane x (N, 1, HW) input row -> (N, Cout, HW)
                acc = acc + wy_ref[(i * K + t) * C + ci] * tap[:, ci:ci + 1, :]

        # ---- xdim: depthwise conv along W (k=K, pad=PX).  Border mask is
        # pre-folded into the (C, HW) weight plane -> a single MAC per tap.
        y = jnp.zeros((N, C, HW), jnp.float32)
        for t in range(K):
            y = y + wx_ref[i * K + t] * _shift_lanes(acc, dw_list[t])

        # ---- fused (1x1 bias conv + BatchNorm2d with batch statistics) ----
        # Stats on the raw xdim output y0, adjusted analytically:
        #   post-bias mean = w*mean0 + b, post-bias var = w^2*var0,
        #   BN(w*y0 + b)   = y0*A + B,  A = w*g*rsqrt(w^2*var0+eps), B = beta - A*mean0
        # (the 1x1 bias b cancels exactly; eps still applies to the post-bias var).
        s1 = jnp.sum(y, axis=(0, 2), keepdims=True)          # (1, C, 1)
        s2 = jnp.sum(y * y, axis=(0, 2), keepdims=True)
        mean0 = s1 * inv_cnt
        # One-pass variance, clamped at 0 to guard the E[x^2]-E[x]^2 cancellation.
        var0 = jnp.maximum(s2 * inv_cnt - mean0 * mean0, 0.0)
        w1 = pc_ref[i * 4 + 0]                               # (C, 1) 1x1 conv weight
        gam = pc_ref[i * 4 + 2]
        bet = pc_ref[i * 4 + 3]
        a_aff = w1 * gam * jax.lax.rsqrt(w1 * w1 * var0 + BN_EPS)   # (1, C, 1)
        b_aff = bet - a_aff * mean0
        y = y * a_aff + b_aff                                # single affine pass
        # TODO(synk): BatchNorm running-mean/var momentum updates (a training
        # side effect) are not reproduced; only the forward output is.

        cur = _leaky(y) if i == 0 else y                     # inner LeakyReLU between stages only

    o_ref[...] = _leaky(cur + x)                             # residual add + outer LeakyReLU


def _pack_params(wy, wx, pc, *, hw, w):
    """Repack parameters into lane-dense planes/columns for the kernel."""
    C = wy.shape[-1]
    # ydim channel-mixing weights: (2, K, Cin, Cout) -> (2*K*Cin, Cout, HW) planes
    # (constant along HW; lane-dense so in-kernel reads are plain vector loads).
    wy_k = jnp.broadcast_to(
        wy.reshape(2 * K * C, C).astype(jnp.float32)[..., None], (2 * K * C, C, hw))
    # xdim depthwise weights with the horizontal border mask folded in:
    col = jnp.arange(hw, dtype=jnp.int32) % w
    masks = jnp.stack(
        [((col + (t - PX) >= 0) & (col + (t - PX) < w)) for t in range(K)]
    ).astype(jnp.float32)                                    # (K, HW)
    wx_k = (wx.reshape(2, K, C).astype(jnp.float32)[..., None]
            * masks[None, :, None, :]).reshape(2 * K, C, hw)  # (2*K, C, HW)
    # per-channel [1x1 w, 1x1 b, bn gamma, bn beta] columns
    pc_k = pc.reshape(2 * 4, C).astype(jnp.float32)[..., None]  # (2*4, C, 1)
    return wy_k, wx_k, pc_k


@functools.partial(jax.jit, static_argnames=("dil", "py"))
def residual_block(x_nchw, params, *, dil, py):
    """ResidualBlock forward. x_nchw: (N, C, H, W) float32 -> (N, C, H, W)."""
    wy, wx, pc = params
    N, C, H, W = x_nchw.shape
    # residual add requires the ydim conv to be shape preserving
    assert py == dil * (K - 1) // 2, "need py == 2*dil for the residual add"

    wy_k, wx_k, pc_k = _pack_params(wy, wx, pc, hw=H * W, w=W)
    x_k = x_nchw.reshape(N, C, H * W).astype(jnp.float32)    # lane-dense view, no transpose

    out = pl.pallas_call(
        functools.partial(_residual_block_kernel, dil=dil, py=py, w=W),
        out_shape=jax.ShapeDtypeStruct((N, C, H * W), jnp.float32),
        in_specs=[pl.BlockSpec(memory_space=pltpu.MemorySpace.VMEM)] * 4,
        out_specs=pl.BlockSpec(memory_space=pltpu.MemorySpace.VMEM),
        # 32 MiB stays within the scoped-VMEM default on every generation
        # (v7x has 64 MiB physical; v5e/v6e have 128 MiB).
        compiler_params=pltpu.CompilerParams(vmem_limit_bytes=32 * 1024 * 1024),
    )(x_k, wy_k, wx_k, pc_k)
    # Production sizes: add a "parallel" batch/row grid (2 TCs on v7x) and turn
    # the BN sum/sumsq into cross-tile accumulators finalized with pl.when;
    # size blocks so ~5-6x block_bytes stays under ~48 MiB on v7x.
    return out.reshape(N, C, H, W)


def init_params(key, ch):
    """Deterministic synthetic parameters (PyTorch-equivalent shapes)."""
    k0, k1, k2, k3, k4, k5 = jax.random.split(key, 6)
    # ydim weight (ch, ch, K, 1)  -> stored as (2, K, Cin, Cout)
    wy = 0.1 * jax.random.normal(k0, (2, K, ch, ch), jnp.float32)
    # xdim weight (ch, 1, 1, K)   -> stored as (2, K, C)
    wx = 0.1 * jax.random.normal(k1, (2, K, ch), jnp.float32)
    # bias conv weight (ch,1,1,1) and bias (ch,); BN gamma/beta (ch,)
    wb = 1.0 + 0.1 * jax.random.normal(k2, (2, ch), jnp.float32)
    bb = 0.1 * jax.random.normal(k3, (2, ch), jnp.float32)
    gamma = 1.0 + 0.1 * jax.random.normal(k4, (2, ch), jnp.float32)
    beta = 0.1 * jax.random.normal(k5, (2, ch), jnp.float32)
    pc = jnp.stack([wb, bb, gamma, beta], axis=1)   # (2, 4, ch)
    return wy, wx, pc


def _ref_forward(x_nchw, wy, wx, pc, *, dil, py):
    """Pure-JAX reference reproducing the PyTorch forward (for validation)."""
    C = x_nchw.shape[1]

    def stage(h, i):
        wy_oihw = jnp.transpose(wy[i], (2, 1, 0))[..., None]      # (Cout, Cin, K, 1)
        o = jax.lax.conv_general_dilated(
            h, wy_oihw, window_strides=(1, 1),
            padding=((py, py), (0, 0)), rhs_dilation=(dil, 1),
            dimension_numbers=('NCHW', 'OIHW', 'NCHW'))
        wx_oihw = jnp.transpose(wx[i], (1, 0))[:, None, None, :]  # (C, 1, 1, K)
        o = jax.lax.conv_general_dilated(
            o, wx_oihw, window_strides=(1, 1),
            padding=((0, 0), (PX, PX)), feature_group_count=C,
            dimension_numbers=('NCHW', 'OIHW', 'NCHW'))
        o = o * pc[i, 0][None, :, None, None] + pc[i, 1][None, :, None, None]
        mean = jnp.mean(o, axis=(0, 2, 3), keepdims=True)
        var = jnp.mean(jnp.square(o - mean), axis=(0, 2, 3), keepdims=True)
        o = ((o - mean) / jnp.sqrt(var + BN_EPS)
             * pc[i, 2][None, :, None, None] + pc[i, 3][None, :, None, None])
        return o

    def leaky(v):
        return jnp.where(v >= 0, v, LEAKY_SLOPE * v)

    h = leaky(stage(x_nchw, 0))
    h = stage(h, 1)
    return leaky(h + x_nchw)


if __name__ == "__main__":
    N, CH, H, W = 2, 4, 16, 16
    DIL = 2
    PY = 2 * DIL      # py must equal dil*(k-1)/2 for the residual add (as in PyTorch)

    key = jax.random.PRNGKey(0)
    kp, kx = jax.random.split(key)
    params = init_params(kp, CH)
    x = jax.random.normal(kx, (N, CH, H, W), jnp.float32)

    out = residual_block(x, params, dil=DIL, py=PY)
    out = jax.block_until_ready(out)

    ref = _ref_forward(x, *params, dil=DIL, py=PY)
    if not jnp.allclose(out, ref, atol=1e-4, rtol=1e-4):
        raise AssertionError(
            f"mismatch vs reference, max abs diff = {float(jnp.max(jnp.abs(out - ref)))}")

    print("KERNEL_OK")
</pallas_src>

<mosaic_0001>
module attributes {stable_mosaic.version = 11 : i64} {
  func.func @_residual_block_kernel(%arg0: memref<2x4x256xf32, #tpu.memory_space<vmem>>, %arg1: memref<40x4x256xf32, #tpu.memory_space<vmem>>, %arg2: memref<10x4x256xf32, #tpu.memory_space<vmem>>, %arg3: memref<8x4x1xf32, #tpu.memory_space<vmem>>, %arg4: memref<2x4x256xf32, #tpu.memory_space<vmem>>) attributes {dimension_semantics = [], scalar_prefetch = 0 : i64, scratch_operands = 0 : i64, tpu.core_type = #tpu.core_type<tc>} {
    %c0 = arith.constant 0 : index
    %c0_0 = arith.constant 0 : index
    %c0_1 = arith.constant 0 : index
    %0 = vector.load %arg0[%c0, %c0_0, %c0_1] : memref<2x4x256xf32, #tpu.memory_space<vmem>>, vector<2x4x256xf32>
    %cst = arith.constant 0.000000e+00 : f32
    %1 = vector.broadcast %cst : f32 to vector<2x4x256xf32>
    %cst_2 = arith.constant 0.000000e+00 : f32
    %2 = vector.broadcast %cst_2 : f32 to vector<2x4x64xf32>
    %3 = vector.extract_strided_slice %0 {offsets = [0, 0, 0], sizes = [2, 4, 192], strides = [1, 1, 1]} : vector<2x4x256xf32> to vector<2x4x192xf32>
    %4 = tpu.concatenate %2, %3 in 2 : vector<2x4x64xf32>, vector<2x4x192xf32> -> vector<2x4x256xf32>
    %c0_3 = arith.constant 0 : index
    %c0_4 = arith.constant 0 : index
    %c0_5 = arith.constant 0 : index
    %5 = vector.load %arg1[%c0_3, %c0_4, %c0_5] : memref<40x4x256xf32, #tpu.memory_space<vmem>>, vector<1x4x256xf32>
    %6 = vector.shape_cast %5 : vector<1x4x256xf32> to vector<4x256xf32>
    %7 = vector.extract_strided_slice %4 {offsets = [0, 0, 0], sizes = [2, 1, 256], strides = [1, 1, 1]} : vector<2x4x256xf32> to vector<2x1x256xf32>
    %8 = vector.shape_cast %6 : vector<4x256xf32> to vector<1x4x256xf32>
    %9 = vector.broadcast %8 : vector<1x4x256xf32> to vector<2x4x256xf32>
    %10 = vector.broadcast %7 : vector<2x1x256xf32> to vector<2x4x256xf32>
    %11 = arith.mulf %9, %10 : vector<2x4x256xf32>
    %12 = arith.addf %1, %11 : vector<2x4x256xf32>
    %c1 = arith.constant 1 : index
    %c0_6 = arith.constant 0 : index
    %c0_7 = arith.constant 0 : index
    %13 = vector.load %arg1[%c1, %c0_6, %c0_7] : memref<40x4x256xf32, #tpu.memory_space<vmem>>, vector<1x4x256xf32>
    %14 = vector.shape_cast %13 : vector<1x4x256xf32> to vector<4x256xf32>
    %15 = vector.extract_strided_slice %4 {offsets = [0, 1, 0], sizes = [2, 1, 256], strides = [1, 1, 1]} : vector<2x4x256xf32> to vector<2x1x256xf32>
    %16 = vector.shape_cast %14 : vector<4x256xf32> to vector<1x4x256xf32>
    %17 = vector.broadcast %16 : vector<1x4x256xf32> to vector<2x4x256xf32>
    %18 = vector.broadcast %15 : vector<2x1x256xf32> to vector<2x4x256xf32>
    %19 = arith.mulf %17, %18 : vector<2x4x256xf32>
    %20 = arith.addf %12, %19 : vector<2x4x256xf32>
    %c2 = arith.constant 2 : index
    %c0_8 = arith.constant 0 : index
    %c0_9 = arith.constant 0 : index
    %21 = vector.load %arg1[%c2, %c0_8, %c0_9] : memref<40x4x256xf32, #tpu.memory_space<vmem>>, vector<1x4x256xf32>
    %22 = vector.shape_cast %21 : vector<1x4x256xf32> to vector<4x256xf32>
    %23 = vector.extract_strided_slice %4 {offsets = [0, 2, 0], sizes = [2, 1, 256], strides = [1, 1, 1]} : vector<2x4x256xf32> to vector<2x1x256xf32>
    %24 = vector.shape_cast %22 : vector<4x256xf32> to vector<1x4x256xf32>
    %25 = vector.broadcast %24 : vector<1x4x256xf32> to vector<2x4x256xf32>
    %26 = vector.broadcast %23 : vector<2x1x256xf32> to vector<2x4x256xf32>
    %27 = arith.mulf %25, %26 : vector<2x4x256xf32>
    %28 = arith.addf %20, %27 : vector<2x4x256xf32>
    %c3 = arith.constant 3 : index
    %c0_10 = arith.constant 0 : index
    %c0_11 = arith.constant 0 : index
    %29 = vector.load %arg1[%c3, %c0_10, %c0_11] : memref<40x4x256xf32, #tpu.memory_space<vmem>>, vector<1x4x256xf32>
    %30 = vector.shape_cast %29 : vector<1x4x256xf32> to vector<4x256xf32>
    %31 = vector.extract_strided_slice %4 {offsets = [0, 3, 0], sizes = [2, 1, 256], strides = [1, 1, 1]} : vector<2x4x256xf32> to vector<2x1x256xf32>
    %32 = vector.shape_cast %30 : vector<4x256xf32> to vector<1x4x256xf32>
    %33 = vector.broadcast %32 : vector<1x4x256xf32> to vector<2x4x256xf32>
    %34 = vector.broadcast %31 : vector<2x1x256xf32> to vector<2x4x256xf32>
    %35 = arith.mulf %33, %34 : vector<2x4x256xf32>
    %36 = arith.addf %28, %35 : vector<2x4x256xf32>
    %cst_12 = arith.constant 0.000000e+00 : f32
    %37 = vector.broadcast %cst_12 : f32 to vector<2x4x32xf32>
    %38 = vector.extract_strided_slice %0 {offsets = [0, 0, 0], sizes = [2, 4, 224], strides = [1, 1, 1]} : vector<2x4x256xf32> to vector<2x4x224xf32>
    %39 = tpu.concatenate %37, %38 in 2 : vector<2x4x32xf32>, vector<2x4x224xf32> -> vector<2x4x256xf32>
    %c4 = arith.constant 4 : index
    %c0_13 = arith.constant 0 : index
    %c0_14 = arith.constant 0 : index
    %40 = vector.load %arg1[%c4, %c0_13, %c0_14] : memref<40x4x256xf32, #tpu.memory_space<vmem>>, vector<1x4x256xf32>
    %41 = vector.shape_cast %40 : vector<1x4x256xf32> to vector<4x256xf32>
    %42 = vector.extract_strided_slice %39 {offsets = [0, 0, 0], sizes = [2, 1, 256], strides = [1, 1, 1]} : vector<2x4x256xf32> to vector<2x1x256xf32>
    %43 = vector.shape_cast %41 : vector<4x256xf32> to vector<1x4x256xf32>
    %44 = vector.broadcast %43 : vector<1x4x256xf32> to vector<2x4x256xf32>
    %45 = vector.broadcast %42 : vector<2x1x256xf32> to vector<2x4x256xf32>
    %46 = arith.mulf %44, %45 : vector<2x4x256xf32>
    %47 = arith.addf %36, %46 : vector<2x4x256xf32>
    %c5 = arith.constant 5 : index
    %c0_15 = arith.constant 0 : index
    %c0_16 = arith.constant 0 : index
    %48 = vector.load %arg1[%c5, %c0_15, %c0_16] : memref<40x4x256xf32, #tpu.memory_space<vmem>>, vector<1x4x256xf32>
    %49 = vector.shape_cast %48 : vector<1x4x256xf32> to vector<4x256xf32>
    %50 = vector.extract_strided_slice %39 {offsets = [0, 1, 0], sizes = [2, 1, 256], strides = [1, 1, 1]} : vector<2x4x256xf32> to vector<2x1x256xf32>
    %51 = vector.shape_cast %49 : vector<4x256xf32> to vector<1x4x256xf32>
    %52 = vector.broadcast %51 : vector<1x4x256xf32> to vector<2x4x256xf32>
    %53 = vector.broadcast %50 : vector<2x1x256xf32> to vector<2x4x256xf32>
    %54 = arith.mulf %52, %53 : vector<2x4x256xf32>
    %55 = arith.addf %47, %54 : vector<2x4x256xf32>
    %c6 = arith.constant 6 : index
    %c0_17 = arith.constant 0 : index
    %c0_18 = arith.constant 0 : index
    %56 = vector.load %arg1[%c6, %c0_17, %c0_18] : memref<40x4x256xf32, #tpu.memory_space<vmem>>, vector<1x4x256xf32>
    %57 = vector.shape_cast %56 : vector<1x4x256xf32> to vector<4x256xf32>
    %58 = vector.extract_strided_slice %39 {offsets = [0, 2, 0], sizes = [2, 1, 256], strides = [1, 1, 1]} : vector<2x4x256xf32> to vector<2x1x256xf32>
    %59 = vector.shape_cast %57 : vector<4x256xf32> to vector<1x4x256xf32>
    %60 = vector.broadcast %59 : vector<1x4x256xf32> to vector<2x4x256xf32>
    %61 = vector.broadcast %58 : vector<2x1x256xf32> to vector<2x4x256xf32>
    %62 = arith.mulf %60, %61 : vector<2x4x256xf32>
    %63 = arith.addf %55, %62 : vector<2x4x256xf32>
    %c7 = arith.constant 7 : index
    %c0_19 = arith.constant 0 : index
    %c0_20 = arith.constant 0 : index
    %64 = vector.load %arg1[%c7, %c0_19, %c0_20] : memref<40x4x256xf32, #tpu.memory_space<vmem>>, vector<1x4x256xf32>
    %65 = vector.shape_cast %64 : vector<1x4x256xf32> to vector<4x256xf32>
    %66 = vector.extract_strided_slice %39 {offsets = [0, 3, 0], sizes = [2, 1, 256], strides = [1, 1, 1]} : vector<2x4x256xf32> to vector<2x1x256xf32>
    %67 = vector.shape_cast %65 : vector<4x256xf32> to vector<1x4x256xf32>
    %68 = vector.broadcast %67 : vector<1x4x256xf32> to vector<2x4x256xf32>
    %69 = vector.broadcast %66 : vector<2x1x256xf32> to vector<2x4x256xf32>
    %70 = arith.mulf %68, %69 : vector<2x4x256xf32>
    %71 = arith.addf %63, %70 : vector<2x4x256xf32>
    %c8 = arith.constant 8 : index
    %c0_21 = arith.constant 0 : index
    %c0_22 = arith.constant 0 : index
    %72 = vector.load %arg1[%c8, %c0_21, %c0_22] : memref<40x4x256xf32, #tpu.memory_space<vmem>>, vector<1x4x256xf32>
    %73 = vector.shape_cast %72 : vector<1x4x256xf32> to vector<4x256xf32>
    %74 = vector.extract_strided_slice %0 {offsets = [0, 0, 0], sizes = [2, 1, 256], strides = [1, 1, 1]} : vector<2x4x256xf32> to vector<2x1x256xf32>
    %75 = vector.shape_cast %73 : vector<4x256xf32> to vector<1x4x256xf32>
    %76 = vector.broadcast %75 : vector<1x4x256xf32> to vector<2x4x256xf32>
    %77 = vector.broadcast %74 : vector<2x1x256xf32> to vector<2x4x256xf32>
    %78 = arith.mulf %76, %77 : vector<2x4x256xf32>
    %79 = arith.addf %71, %78 : vector<2x4x256xf32>
    %c9 = arith.constant 9 : index
    %c0_23 = arith.constant 0 : index
    %c0_24 = arith.constant 0 : index
    %80 = vector.load %arg1[%c9, %c0_23, %c0_24] : memref<40x4x256xf32, #tpu.memory_space<vmem>>, vector<1x4x256xf32>
    %81 = vector.shape_cast %80 : vector<1x4x256xf32> to vector<4x256xf32>
    %82 = vector.extract_strided_slice %0 {offsets = [0, 1, 0], sizes = [2, 1, 256], strides = [1, 1, 1]} : vector<2x4x256xf32> to vector<2x1x256xf32>
    %83 = vector.shape_cast %81 : vector<4x256xf32> to vector<1x4x256xf32>
    %84 = vector.broadcast %83 : vector<1x4x256xf32> to vector<2x4x256xf32>
    %85 = vector.broadcast %82 : vector<2x1x256xf32> to vector<2x4x256xf32>
    %86 = arith.mulf %84, %85 : vector<2x4x256xf32>
    %87 = arith.addf %79, %86 : vector<2x4x256xf32>
    %c10 = arith.constant 10 : index
    %c0_25 = arith.constant 0 : index
    %c0_26 = arith.constant 0 : index
    %88 = vector.load %arg1[%c10, %c0_25, %c0_26] : memref<40x4x256xf32, #tpu.memory_space<vmem>>, vector<1x4x256xf32>
    %89 = vector.shape_cast %88 : vector<1x4x256xf32> to vector<4x256xf32>
    %90 = vector.extract_strided_slice %0 {offsets = [0, 2, 0], sizes = [2, 1, 256], strides = [1, 1, 1]} : vector<2x4x256xf32> to vector<2x1x256xf32>
    %91 = vector.shape_cast %89 : vector<4x256xf32> to vector<1x4x256xf32>
    %92 = vector.broadcast %91 : vector<1x4x256xf32> to vector<2x4x256xf32>
    %93 = vector.broadcast %90 : vector<2x1x256xf32> to vector<2x4x256xf32>
    %94 = arith.mulf %92, %93 : vector<2x4x256xf32>
    %95 = arith.addf %87, %94 : vector<2x4x256xf32>
    %c11 = arith.constant 11 : index
    %c0_27 = arith.constant 0 : index
    %c0_28 = arith.constant 0 : index
    %96 = vector.load %arg1[%c11, %c0_27, %c0_28] : memref<40x4x256xf32, #tpu.memory_space<vmem>>, vector<1x4x256xf32>
    %97 = vector.shape_cast %96 : vector<1x4x256xf32> to vector<4x256xf32>
    %98 = vector.extract_strided_slice %0 {offsets = [0, 3, 0], sizes = [2, 1, 256], strides = [1, 1, 1]} : vector<2x4x256xf32> to vector<2x1x256xf32>
    %99 = vector.shape_cast %97 : vector<4x256xf32> to vector<1x4x256xf32>
    %100 = vector.broadcast %99 : vector<1x4x256xf32> to vector<2x4x256xf32>
    %101 = vector.broadcast %98 : vector<2x1x256xf32> to vector<2x4x256xf32>
    %102 = arith.mulf %100, %101 : vector<2x4x256xf32>
    %103 = arith.addf %95, %102 : vector<2x4x256xf32>
    %cst_29 = arith.constant 0.000000e+00 : f32
    %104 = vector.broadcast %cst_29 : f32 to vector<2x4x32xf32>
    %105 = vector.extract_strided_slice %0 {offsets = [0, 0, 32], sizes = [2, 4, 224], strides = [1, 1, 1]} : vector<2x4x256xf32> to vector<2x4x224xf32>
    %106 = tpu.concatenate %105, %104 in 2 : vector<2x4x224xf32>, vector<2x4x32xf32> -> vector<2x4x256xf32>
    %c12 = arith.constant 12 : index
    %c0_30 = arith.constant 0 : index
    %c0_31 = arith.constant 0 : index
    %107 = vector.load %arg1[%c12, %c0_30, %c0_31] : memref<40x4x256xf32, #tpu.memory_space<vmem>>, vector<1x4x256xf32>
    %108 = vector.shape_cast %107 : vector<1x4x256xf32> to vector<4x256xf32>
    %109 = vector.extract_strided_slice %106 {offsets = [0, 0, 0], sizes = [2, 1, 256], strides = [1, 1, 1]} : vector<2x4x256xf32> to vector<2x1x256xf32>
    %110 = vector.shape_cast %108 : vector<4x256xf32> to vector<1x4x256xf32>
    %111 = vector.broadcast %110 : vector<1x4x256xf32> to vector<2x4x256xf32>
    %112 = vector.broadcast %109 : vector<2x1x256xf32> to vector<2x4x256xf32>
    %113 = arith.mulf %111, %112 : vector<2x4x256xf32>
    %114 = arith.addf %103, %113 : vector<2x4x256xf32>
    %c13 = arith.constant 13 : index
    %c0_32 = arith.constant 0 : index
    %c0_33 = arith.constant 0 : index
    %115 = vector.load %arg1[%c13, %c0_32, %c0_33] : memref<40x4x256xf32, #tpu.memory_space<vmem>>, vector<1x4x256xf32>
    %116 = vector.shape_cast %115 : vector<1x4x256xf32> to vector<4x256xf32>
    %117 = vector.extract_strided_slice %106 {offsets = [0, 1, 0], sizes = [2, 1, 256], strides = [1, 1, 1]} : vector<2x4x256xf32> to vector<2x1x256xf32>
    %118 = vector.shape_cast %116 : vector<4x256xf32> to vector<1x4x256xf32>
    %119 = vector.broadcast %118 : vector<1x4x256xf32> to vector<2x4x256xf32>
    %120 = vector.broadcast %117 : vector<2x1x256xf32> to vector<2x4x256xf32>
    %121 = arith.mulf %119, %120 : vector<2x4x256xf32>
    %122 = arith.addf %114, %121 : vector<2x4x256xf32>
    %c14 = arith.constant 14 : index
    %c0_34 = arith.constant 0 : index
    %c0_35 = arith.constant 0 : index
    %123 = vector.load %arg1[%c14, %c0_34, %c0_35] : memref<40x4x256xf32, #tpu.memory_space<vmem>>, vector<1x4x256xf32>
    %124 = vector.shape_cast %123 : vector<1x4x256xf32> to vector<4x256xf32>
    %125 = vector.extract_strided_slice %106 {offsets = [0, 2, 0], sizes = [2, 1, 256], strides = [1, 1, 1]} : vector<2x4x256xf32> to vector<2x1x256xf32>
    %126 = vector.shape_cast %124 : vector<4x256xf32> to vector<1x4x256xf32>
    %127 = vector.broadcast %126 : vector<1x4x256xf32> to vector<2x4x256xf32>
    %128 = vector.broadcast %125 : vector<2x1x256xf32> to vector<2x4x256xf32>
    %129 = arith.mulf %127, %128 : vector<2x4x256xf32>
    %130 = arith.addf %122, %129 : vector<2x4x256xf32>
    %c15 = arith.constant 15 : index
    %c0_36 = arith.constant 0 : index
    %c0_37 = arith.constant 0 : index
    %131 = vector.load %arg1[%c15, %c0_36, %c0_37] : memref<40x4x256xf32, #tpu.memory_space<vmem>>, vector<1x4x256xf32>
    %132 = vector.shape_cast %131 : vector<1x4x256xf32> to vector<4x256xf32>
    %133 = vector.extract_strided_slice %106 {offsets = [0, 3, 0], sizes = [2, 1, 256], strides = [1, 1, 1]} : vector<2x4x256xf32> to vector<2x1x256xf32>
    %134 = vector.shape_cast %132 : vector<4x256xf32> to vector<1x4x256xf32>
    %135 = vector.broadcast %134 : vector<1x4x256xf32> to vector<2x4x256xf32>
    %136 = vector.broadcast %133 : vector<2x1x256xf32> to vector<2x4x256xf32>
    %137 = arith.mulf %135, %136 : vector<2x4x256xf32>
    %138 = arith.addf %130, %137 : vector<2x4x256xf32>
    %cst_38 = arith.constant 0.000000e+00 : f32
    %139 = vector.broadcast %cst_38 : f32 to vector<2x4x64xf32>
    %140 = vector.extract_strided_slice %0 {offsets = [0, 0, 64], sizes = [2, 4, 192], strides = [1, 1, 1]} : vector<2x4x256xf32> to vector<2x4x192xf32>
    %141 = tpu.concatenate %140, %139 in 2 : vector<2x4x192xf32>, vector<2x4x64xf32> -> vector<2x4x256xf32>
    %c16 = arith.constant 16 : index
    %c0_39 = arith.constant 0 : index
    %c0_40 = arith.constant 0 : index
    %142 = vector.load %arg1[%c16, %c0_39, %c0_40] : memref<40x4x256xf32, #tpu.memory_space<vmem>>, vector<1x4x256xf32>
    %143 = vector.shape_cast %142 : vector<1x4x256xf32> to vector<4x256xf32>
    %144 = vector.extract_strided_slice %141 {offsets = [0, 0, 0], sizes = [2, 1, 256], strides = [1, 1, 1]} : vector<2x4x256xf32> to vector<2x1x256xf32>
    %145 = vector.shape_cast %143 : vector<4x256xf32> to vector<1x4x256xf32>
    %146 = vector.broadcast %145 : vector<1x4x256xf32> to vector<2x4x256xf32>
    %147 = vector.broadcast %144 : vector<2x1x256xf32> to vector<2x4x256xf32>
    %148 = arith.mulf %146, %147 : vector<2x4x256xf32>
    %149 = arith.addf %138, %148 : vector<2x4x256xf32>
    %c17 = arith.constant 17 : index
    %c0_41 = arith.constant 0 : index
    %c0_42 = arith.constant 0 : index
    %150 = vector.load %arg1[%c17, %c0_41, %c0_42] : memref<40x4x256xf32, #tpu.memory_space<vmem>>, vector<1x4x256xf32>
    %151 = vector.shape_cast %150 : vector<1x4x256xf32> to vector<4x256xf32>
    %152 = vector.extract_strided_slice %141 {offsets = [0, 1, 0], sizes = [2, 1, 256], strides = [1, 1, 1]} : vector<2x4x256xf32> to vector<2x1x256xf32>
    %153 = vector.shape_cast %151 : vector<4x256xf32> to vector<1x4x256xf32>
    %154 = vector.broadcast %153 : vector<1x4x256xf32> to vector<2x4x256xf32>
    %155 = vector.broadcast %152 : vector<2x1x256xf32> to vector<2x4x256xf32>
    %156 = arith.mulf %154, %155 : vector<2x4x256xf32>
    %157 = arith.addf %149, %156 : vector<2x4x256xf32>
    %c18 = arith.constant 18 : index
    %c0_43 = arith.constant 0 : index
    %c0_44 = arith.constant 0 : index
    %158 = vector.load %arg1[%c18, %c0_43, %c0_44] : memref<40x4x256xf32, #tpu.memory_space<vmem>>, vector<1x4x256xf32>
    %159 = vector.shape_cast %158 : vector<1x4x256xf32> to vector<4x256xf32>
    %160 = vector.extract_strided_slice %141 {offsets = [0, 2, 0], sizes = [2, 1, 256], strides = [1, 1, 1]} : vector<2x4x256xf32> to vector<2x1x256xf32>
    %161 = vector.shape_cast %159 : vector<4x256xf32> to vector<1x4x256xf32>
    %162 = vector.broadcast %161 : vector<1x4x256xf32> to vector<2x4x256xf32>
    %163 = vector.broadcast %160 : vector<2x1x256xf32> to vector<2x4x256xf32>
    %164 = arith.mulf %162, %163 : vector<2x4x256xf32>
    %165 = arith.addf %157, %164 : vector<2x4x256xf32>
    %c19 = arith.constant 19 : index
    %c0_45 = arith.constant 0 : index
    %c0_46 = arith.constant 0 : index
    %166 = vector.load %arg1[%c19, %c0_45, %c0_46] : memref<40x4x256xf32, #tpu.memory_space<vmem>>, vector<1x4x256xf32>
    %167 = vector.shape_cast %166 : vector<1x4x256xf32> to vector<4x256xf32>
    %168 = vector.extract_strided_slice %141 {offsets = [0, 3, 0], sizes = [2, 1, 256], strides = [1, 1, 1]} : vector<2x4x256xf32> to vector<2x1x256xf32>
    %169 = vector.shape_cast %167 : vector<4x256xf32> to vector<1x4x256xf32>
    %170 = vector.broadcast %169 : vector<1x4x256xf32> to vector<2x4x256xf32>
    %171 = vector.broadcast %168 : vector<2x1x256xf32> to vector<2x4x256xf32>
    %172 = arith.mulf %170, %171 : vector<2x4x256xf32>
    %173 = arith.addf %165, %172 : vector<2x4x256xf32>
    %cst_47 = arith.constant 0.000000e+00 : f32
    %174 = vector.broadcast %cst_47 : f32 to vector<2x4x256xf32>
    %c0_48 = arith.constant 0 : index
    %c0_49 = arith.constant 0 : index
    %c0_50 = arith.constant 0 : index
    %175 = vector.load %arg2[%c0_48, %c0_49, %c0_50] : memref<10x4x256xf32, #tpu.memory_space<vmem>>, vector<1x4x256xf32>
    %176 = vector.shape_cast %175 : vector<1x4x256xf32> to vector<4x256xf32>
    %cst_51 = arith.constant 0.000000e+00 : f32
    %177 = vector.broadcast %cst_51 : f32 to vector<2x4x2xf32>
    %178 = vector.extract_strided_slice %173 {offsets = [0, 0, 0], sizes = [2, 4, 254], strides = [1, 1, 1]} : vector<2x4x256xf32> to vector<2x4x254xf32>
    %179 = tpu.concatenate %177, %178 in 2 : vector<2x4x2xf32>, vector<2x4x254xf32> -> vector<2x4x256xf32>
    %180 = vector.shape_cast %176 : vector<4x256xf32> to vector<1x4x256xf32>
    %181 = vector.broadcast %180 : vector<1x4x256xf32> to vector<2x4x256xf32>
    %182 = arith.mulf %181, %179 : vector<2x4x256xf32>
    %183 = arith.addf %174, %182 : vector<2x4x256xf32>
    %c1_52 = arith.constant 1 : index
    %c0_53 = arith.constant 0 : index
    %c0_54 = arith.constant 0 : index
    %184 = vector.load %arg2[%c1_52, %c0_53, %c0_54] : memref<10x4x256xf32, #tpu.memory_space<vmem>>, vector<1x4x256xf32>
    %185 = vector.shape_cast %184 : vector<1x4x256xf32> to vector<4x256xf32>
    %cst_55 = arith.constant 0.000000e+00 : f32
    %186 = vector.broadcast %cst_55 : f32 to vector<2x4x1xf32>
    %187 = vector.extract_strided_slice %173 {offsets = [0, 0, 0], sizes = [2, 4, 255], strides = [1, 1, 1]} : vector<2x4x256xf32> to vector<2x4x255xf32>
    %188 = tpu.concatenate %186, %187 in 2 : vector<2x4x1xf32>, vector<2x4x255xf32> -> vector<2x4x256xf32>
    %189 = vector.shape_cast %185 : vector<4x256xf32> to vector<1x4x256xf32>
    %190 = vector.broadcast %189 : vector<1x4x256xf32> to vector<2x4x256xf32>
    %191 = arith.mulf %190, %188 : vector<2x4x256xf32>
    %192 = arith.addf %183, %191 : vector<2x4x256xf32>
    %c2_56 = arith.constant 2 : index
    %c0_57 = arith.constant 0 : index
    %c0_58 = arith.constant 0 : index
    %193 = vector.load %arg2[%c2_56, %c0_57, %c0_58] : memref<10x4x256xf32, #tpu.memory_space<vmem>>, vector<1x4x256xf32>
    %194 = vector.shape_cast %193 : vector<1x4x256xf32> to vector<4x256xf32>
    %195 = vector.shape_cast %194 : vector<4x256xf32> to vector<1x4x256xf32>
    %196 = vector.broadcast %195 : vector<1x4x256xf32> to vector<2x4x256xf32>
    %197 = arith.mulf %196, %173 : vector<2x4x256xf32>
    %198 = arith.addf %192, %197 : vector<2x4x256xf32>
    %c3_59 = arith.constant 3 : index
    %c0_60 = arith.constant 0 : index
    %c0_61 = arith.constant 0 : index
    %199 = vector.load %arg2[%c3_59, %c0_60, %c0_61] : memref<10x4x256xf32, #tpu.memory_space<vmem>>, vector<1x4x256xf32>
    %200 = vector.shape_cast %199 : vector<1x4x256xf32> to vector<4x256xf32>
    %cst_62 = arith.constant 0.000000e+00 : f32
    %201 = vector.broadcast %cst_62 : f32 to vector<2x4x1xf32>
    %202 = vector.extract_strided_slice %173 {offsets = [0, 0, 1], sizes = [2, 4, 255], strides = [1, 1, 1]} : vector<2x4x256xf32> to vector<2x4x255xf32>
    %203 = tpu.concatenate %202, %201 in 2 : vector<2x4x255xf32>, vector<2x4x1xf32> -> vector<2x4x256xf32>
    %204 = vector.shape_cast %200 : vector<4x256xf32> to vector<1x4x256xf32>
    %205 = vector.broadcast %204 : vector<1x4x256xf32> to vector<2x4x256xf32>
    %206 = arith.mulf %205, %203 : vector<2x4x256xf32>
    %207 = arith.addf %198, %206 : vector<2x4x256xf32>
    %c4_63 = arith.constant 4 : index
    %c0_64 = arith.constant 0 : index
    %c0_65 = arith.constant 0 : index
    %208 = vector.load %arg2[%c4_63, %c0_64, %c0_65] : memref<10x4x256xf32, #tpu.memory_space<vmem>>, vector<1x4x256xf32>
    %209 = vector.shape_cast %208 : vector<1x4x256xf32> to vector<4x256xf32>
    %cst_66 = arith.constant 0.000000e+00 : f32
    %210 = vector.broadcast %cst_66 : f32 to vector<2x4x2xf32>
    %211 = vector.extract_strided_slice %173 {offsets = [0, 0, 2], sizes = [2, 4, 254], strides = [1, 1, 1]} : vector<2x4x256xf32> to vector<2x4x254xf32>
    %212 = tpu.concatenate %211, %210 in 2 : vector<2x4x254xf32>, vector<2x4x2xf32> -> vector<2x4x256xf32>
    %213 = vector.shape_cast %209 : vector<4x256xf32> to vector<1x4x256xf32>
    %214 = vector.broadcast %213 : vector<1x4x256xf32> to vector<2x4x256xf32>
    %215 = arith.mulf %214, %212 : vector<2x4x256xf32>
    %216 = arith.addf %207, %215 : vector<2x4x256xf32>
    %cst_67 = arith.constant dense<0.000000e+00> : vector<4xf32>
    %217 = vector.multi_reduction <add>, %216, %cst_67 [0, 2] : vector<2x4x256xf32> to vector<4xf32>
    %218 = vector.shape_cast %217 : vector<4xf32> to vector<1x4x1xf32>
    %219 = arith.mulf %216, %216 : vector<2x4x256xf32>
    %cst_68 = arith.constant dense<0.000000e+00> : vector<4xf32>
    %220 = vector.multi_reduction <add>, %219, %cst_68 [0, 2] : vector<2x4x256xf32> to vector<4xf32>
    %221 = vector.shape_cast %220 : vector<4xf32> to vector<1x4x1xf32>
    %cst_69 = arith.constant 0.001953125 : f32
    %222 = vector.broadcast %cst_69 : f32 to vector<1x4x1xf32>
    %223 = arith.mulf %218, %222 : vector<1x4x1xf32>
    %cst_70 = arith.constant 0.001953125 : f32
    %224 = vector.broadcast %cst_70 : f32 to vector<1x4x1xf32>
    %225 = arith.mulf %221, %224 : vector<1x4x1xf32>
    %226 = arith.mulf %223, %223 : vector<1x4x1xf32>
    %227 = arith.subf %225, %226 : vector<1x4x1xf32>
    %cst_71 = arith.constant 0.000000e+00 : f32
    %228 = vector.broadcast %cst_71 : f32 to vector<1x4x1xf32>
    %229 = arith.maximumf %227, %228 : vector<1x4x1xf32>
    %c0_72 = arith.constant 0 : index
    %c0_73 = arith.constant 0 : index
    %c0_74 = arith.constant 0 : index
    %230 = vector.load %arg3[%c0_72, %c0_73, %c0_74] : memref<8x4x1xf32, #tpu.memory_space<vmem>>, vector<1x4x1xf32>
    %231 = vector.shape_cast %230 : vector<1x4x1xf32> to vector<4x1xf32>
    %c2_75 = arith.constant 2 : index
    %c0_76 = arith.constant 0 : index
    %c0_77 = arith.constant 0 : index
    %232 = vector.load %arg3[%c2_75, %c0_76, %c0_77] : memref<8x4x1xf32, #tpu.memory_space<vmem>>, vector<1x4x1xf32>
    %233 = vector.shape_cast %232 : vector<1x4x1xf32> to vector<4x1xf32>
    %c3_78 = arith.constant 3 : index
    %c0_79 = arith.constant 0 : index
    %c0_80 = arith.constant 0 : index
    %234 = vector.load %arg3[%c3_78, %c0_79, %c0_80] : memref<8x4x1xf32, #tpu.memory_space<vmem>>, vector<1x4x1xf32>
    %235 = vector.shape_cast %234 : vector<1x4x1xf32> to vector<4x1xf32>
    %236 = arith.mulf %231, %233 : vector<4x1xf32>
    %237 = arith.mulf %231, %231 : vector<4x1xf32>
    %238 = vector.shape_cast %237 : vector<4x1xf32> to vector<1x4x1xf32>
    %239 = arith.mulf %238, %229 : vector<1x4x1xf32>
    %cst_81 = arith.constant 9.99999974E-6 : f32
    %240 = vector.broadcast %cst_81 : f32 to vector<1x4x1xf32>
    %241 = arith.addf %239, %240 : vector<1x4x1xf32>
    %242 = math.rsqrt %241 : vector<1x4x1xf32>
    %243 = vector.shape_cast %236 : vector<4x1xf32> to vector<1x4x1xf32>
    %244 = arith.mulf %243, %242 : vector<1x4x1xf32>
    %245 = arith.mulf %244, %223 : vector<1x4x1xf32>
    %246 = vector.shape_cast %235 : vector<4x1xf32> to vector<1x4x1xf32>
    %247 = arith.subf %246, %245 : vector<1x4x1xf32>
    %248 = vector.broadcast %244 : vector<1x4x1xf32> to vector<2x4x256xf32>
    %249 = arith.mulf %216, %248 : vector<2x4x256xf32>
    %250 = vector.broadcast %247 : vector<1x4x1xf32> to vector<2x4x256xf32>
    %251 = arith.addf %249, %250 : vector<2x4x256xf32>
    %cst_82 = arith.constant 0.00999999977 : f32
    %252 = vector.broadcast %cst_82 : f32 to vector<2x4x256xf32>
    %253 = arith.mulf %252, %251 : vector<2x4x256xf32>
    %254 = arith.maximumf %251, %253 : vector<2x4x256xf32>
    %cst_83 = arith.constant 0.000000e+00 : f32
    %255 = vector.broadcast %cst_83 : f32 to vector<2x4x256xf32>
    %cst_84 = arith.constant 0.000000e+00 : f32
    %256 = vector.broadcast %cst_84 : f32 to vector<2x4x64xf32>
    %257 = vector.extract_strided_slice %254 {offsets = [0, 0, 0], sizes = [2, 4, 192], strides = [1, 1, 1]} : vector<2x4x256xf32> to vector<2x4x192xf32>
    %258 = tpu.concatenate %256, %257 in 2 : vector<2x4x64xf32>, vector<2x4x192xf32> -> vector<2x4x256xf32>
    %c20 = arith.constant 20 : index
    %c0_85 = arith.constant 0 : index
    %c0_86 = arith.constant 0 : index
    %259 = vector.load %arg1[%c20, %c0_85, %c0_86] : memref<40x4x256xf32, #tpu.memory_space<vmem>>, vector<1x4x256xf32>
    %260 = vector.shape_cast %259 : vector<1x4x256xf32> to vector<4x256xf32>
    %261 = vector.extract_strided_slice %258 {offsets = [0, 0, 0], sizes = [2, 1, 256], strides = [1, 1, 1]} : vector<2x4x256xf32> to vector<2x1x256xf32>
    %262 = vector.shape_cast %260 : vector<4x256xf32> to vector<1x4x256xf32>
    %263 = vector.broadcast %262 : vector<1x4x256xf32> to vector<2x4x256xf32>
    %264 = vector.broadcast %261 : vector<2x1x256xf32> to vector<2x4x256xf32>
    %265 = arith.mulf %263, %264 : vector<2x4x256xf32>
    %266 = arith.addf %255, %265 : vector<2x4x256xf32>
    %c21 = arith.constant 21 : index
    %c0_87 = arith.constant 0 : index
    %c0_88 = arith.constant 0 : index
    %267 = vector.load %arg1[%c21, %c0_87, %c0_88] : memref<40x4x256xf32, #tpu.memory_space<vmem>>, vector<1x4x256xf32>
    %268 = vector.shape_cast %267 : vector<1x4x256xf32> to vector<4x256xf32>
    %269 = vector.extract_strided_slice %258 {offsets = [0, 1, 0], sizes = [2, 1, 256], strides = [1, 1, 1]} : vector<2x4x256xf32> to vector<2x1x256xf32>
    %270 = vector.shape_cast %268 : vector<4x256xf32> to vector<1x4x256xf32>
    %271 = vector.broadcast %270 : vector<1x4x256xf32> to vector<2x4x256xf32>
    %272 = vector.broadcast %269 : vector<2x1x256xf32> to vector<2x4x256xf32>
    %273 = arith.mulf %271, %272 : vector<2x4x256xf32>
    %274 = arith.addf %266, %273 : vector<2x4x256xf32>
    %c22 = arith.constant 22 : index
    %c0_89 = arith.constant 0 : index
    %c0_90 = arith.constant 0 : index
    %275 = vector.load %arg1[%c22, %c0_89, %c0_90] : memref<40x4x256xf32, #tpu.memory_space<vmem>>, vector<1x4x256xf32>
    %276 = vector.shape_cast %275 : vector<1x4x256xf32> to vector<4x256xf32>
    %277 = vector.extract_strided_slice %258 {offsets = [0, 2, 0], sizes = [2, 1, 256], strides = [1, 1, 1]} : vector<2x4x256xf32> to vector<2x1x256xf32>
    %278 = vector.shape_cast %276 : vector<4x256xf32> to vector<1x4x256xf32>
    %279 = vector.broadcast %278 : vector<1x4x256xf32> to vector<2x4x256xf32>
    %280 = vector.broadcast %277 : vector<2x1x256xf32> to vector<2x4x256xf32>
    %281 = arith.mulf %279, %280 : vector<2x4x256xf32>
    %282 = arith.addf %274, %281 : vector<2x4x256xf32>
    %c23 = arith.constant 23 : index
    %c0_91 = arith.constant 0 : index
    %c0_92 = arith.constant 0 : index
    %283 = vector.load %arg1[%c23, %c0_91, %c0_92] : memref<40x4x256xf32, #tpu.memory_space<vmem>>, vector<1x4x256xf32>
    %284 = vector.shape_cast %283 : vector<1x4x256xf32> to vector<4x256xf32>
    %285 = vector.extract_strided_slice %258 {offsets = [0, 3, 0], sizes = [2, 1, 256], strides = [1, 1, 1]} : vector<2x4x256xf32> to vector<2x1x256xf32>
    %286 = vector.shape_cast %284 : vector<4x256xf32> to vector<1x4x256xf32>
    %287 = vector.broadcast %286 : vector<1x4x256xf32> to vector<2x4x256xf32>
    %288 = vector.broadcast %285 : vector<2x1x256xf32> to vector<2x4x256xf32>
    %289 = arith.mulf %287, %288 : vector<2x4x256xf32>
    %290 = arith.addf %282, %289 : vector<2x4x256xf32>
    %cst_93 = arith.constant 0.000000e+00 : f32
    %291 = vector.broadcast %cst_93 : f32 to vector<2x4x32xf32>
    %292 = vector.extract_strided_slice %254 {offsets = [0, 0, 0], sizes = [2, 4, 224], strides = [1, 1, 1]} : vector<2x4x256xf32> to vector<2x4x224xf32>
    %293 = tpu.concatenate %291, %292 in 2 : vector<2x4x32xf32>, vector<2x4x224xf32> -> vector<2x4x256xf32>
    %c24 = arith.constant 24 : index
    %c0_94 = arith.constant 0 : index
    %c0_95 = arith.constant 0 : index
    %294 = vector.load %arg1[%c24, %c0_94, %c0_95] : memref<40x4x256xf32, #tpu.memory_space<vmem>>, vector<1x4x256xf32>
    %295 = vector.shape_cast %294 : vector<1x4x256xf32> to vector<4x256xf32>
    %296 = vector.extract_strided_slice %293 {offsets = [0, 0, 0], sizes = [2, 1, 256], strides = [1, 1, 1]} : vector<2x4x256xf32> to vector<2x1x256xf32>
    %297 = vector.shape_cast %295 : vector<4x256xf32> to vector<1x4x256xf32>
    %298 = vector.broadcast %297 : vector<1x4x256xf32> to vector<2x4x256xf32>
    %299 = vector.broadcast %296 : vector<2x1x256xf32> to vector<2x4x256xf32>
    %300 = arith.mulf %298, %299 : vector<2x4x256xf32>
    %301 = arith.addf %290, %300 : vector<2x4x256xf32>
    %c25 = arith.constant 25 : index
    %c0_96 = arith.constant 0 : index
    %c0_97 = arith.constant 0 : index
    %302 = vector.load %arg1[%c25, %c0_96, %c0_97] : memref<40x4x256xf32, #tpu.memory_space<vmem>>, vector<1x4x256xf32>
    %303 = vector.shape_cast %302 : vector<1x4x256xf32> to vector<4x256xf32>
    %304 = vector.extract_strided_slice %293 {offsets = [0, 1, 0], sizes = [2, 1, 256], strides = [1, 1, 1]} : vector<2x4x256xf32> to vector<2x1x256xf32>
    %305 = vector.shape_cast %303 : vector<4x256xf32> to vector<1x4x256xf32>
    %306 = vector.broadcast %305 : vector<1x4x256xf32> to vector<2x4x256xf32>
    %307 = vector.broadcast %304 : vector<2x1x256xf32> to vector<2x4x256xf32>
    %308 = arith.mulf %306, %307 : vector<2x4x256xf32>
    %309 = arith.addf %301, %308 : vector<2x4x256xf32>
    %c26 = arith.constant 26 : index
    %c0_98 = arith.constant 0 : index
    %c0_99 = arith.constant 0 : index
    %310 = vector.load %arg1[%c26, %c0_98, %c0_99] : memref<40x4x256xf32, #tpu.memory_space<vmem>>, vector<1x4x256xf32>
    %311 = vector.shape_cast %310 : vector<1x4x256xf32> to vector<4x256xf32>
    %312 = vector.extract_strided_slice %293 {offsets = [0, 2, 0], sizes = [2, 1, 256], strides = [1, 1, 1]} : vector<2x4x256xf32> to vector<2x1x256xf32>
    %313 = vector.shape_cast %311 : vector<4x256xf32> to vector<1x4x256xf32>
    %314 = vector.broadcast %313 : vector<1x4x256xf32> to vector<2x4x256xf32>
    %315 = vector.broadcast %312 : vector<2x1x256xf32> to vector<2x4x256xf32>
    %316 = arith.mulf %314, %315 : vector<2x4x256xf32>
    %317 = arith.addf %309, %316 : vector<2x4x256xf32>
    %c27 = arith.constant 27 : index
    %c0_100 = arith.constant 0 : index
    %c0_101 = arith.constant 0 : index
    %318 = vector.load %arg1[%c27, %c0_100, %c0_101] : memref<40x4x256xf32, #tpu.memory_space<vmem>>, vector<1x4x256xf32>
    %319 = vector.shape_cast %318 : vector<1x4x256xf32> to vector<4x256xf32>
    %320 = vector.extract_strided_slice %293 {offsets = [0, 3, 0], sizes = [2, 1, 256], strides = [1, 1, 1]} : vector<2x4x256xf32> to vector<2x1x256xf32>
    %321 = vector.shape_cast %319 : vector<4x256xf32> to vector<1x4x256xf32>
    %322 = vector.broadcast %321 : vector<1x4x256xf32> to vector<2x4x256xf32>
    %323 = vector.broadcast %320 : vector<2x1x256xf32> to vector<2x4x256xf32>
    %324 = arith.mulf %322, %323 : vector<2x4x256xf32>
    %325 = arith.addf %317, %324 : vector<2x4x256xf32>
    %c28 = arith.constant 28 : index
    %c0_102 = arith.constant 0 : index
    %c0_103 = arith.constant 0 : index
    %326 = vector.load %arg1[%c28, %c0_102, %c0_103] : memref<40x4x256xf32, #tpu.memory_space<vmem>>, vector<1x4x256xf32>
    %327 = vector.shape_cast %326 : vector<1x4x256xf32> to vector<4x256xf32>
    %328 = vector.extract_strided_slice %254 {offsets = [0, 0, 0], sizes = [2, 1, 256], strides = [1, 1, 1]} : vector<2x4x256xf32> to vector<2x1x256xf32>
    %329 = vector.shape_cast %327 : vector<4x256xf32> to vector<1x4x256xf32>
    %330 = vector.broadcast %329 : vector<1x4x256xf32> to vector<2x4x256xf32>
    %331 = vector.broadcast %328 : vector<2x1x256xf32> to vector<2x4x256xf32>
    %332 = arith.mulf %330, %331 : vector<2x4x256xf32>
    %333 = arith.addf %325, %332 : vector<2x4x256xf32>
    %c29 = arith.constant 29 : index
    %c0_104 = arith.constant 0 : index
    %c0_105 = arith.constant 0 : index
    %334 = vector.load %arg1[%c29, %c0_104, %c0_105] : memref<40x4x256xf32, #tpu.memory_space<vmem>>, vector<1x4x256xf32>
    %335 = vector.shape_cast %334 : vector<1x4x256xf32> to vector<4x256xf32>
    %336 = vector.extract_strided_slice %254 {offsets = [0, 1, 0], sizes = [2, 1, 256], strides = [1, 1, 1]} : vector<2x4x256xf32> to vector<2x1x256xf32>
    %337 = vector.shape_cast %335 : vector<4x256xf32> to vector<1x4x256xf32>
    %338 = vector.broadcast %337 : vector<1x4x256xf32> to vector<2x4x256xf32>
    %339 = vector.broadcast %336 : vector<2x1x256xf32> to vector<2x4x256xf32>
    %340 = arith.mulf %338, %339 : vector<2x4x256xf32>
    %341 = arith.addf %333, %340 : vector<2x4x256xf32>
    %c30 = arith.constant 30 : index
    %c0_106 = arith.constant 0 : index
    %c0_107 = arith.constant 0 : index
    %342 = vector.load %arg1[%c30, %c0_106, %c0_107] : memref<40x4x256xf32, #tpu.memory_space<vmem>>, vector<1x4x256xf32>
    %343 = vector.shape_cast %342 : vector<1x4x256xf32> to vector<4x256xf32>
    %344 = vector.extract_strided_slice %254 {offsets = [0, 2, 0], sizes = [2, 1, 256], strides = [1, 1, 1]} : vector<2x4x256xf32> to vector<2x1x256xf32>
    %345 = vector.shape_cast %343 : vector<4x256xf32> to vector<1x4x256xf32>
    %346 = vector.broadcast %345 : vector<1x4x256xf32> to vector<2x4x256xf32>
    %347 = vector.broadcast %344 : vector<2x1x256xf32> to vector<2x4x256xf32>
    %348 = arith.mulf %346, %347 : vector<2x4x256xf32>
    %349 = arith.addf %341, %348 : vector<2x4x256xf32>
    %c31 = arith.constant 31 : index
    %c0_108 = arith.constant 0 : index
    %c0_109 = arith.constant 0 : index
    %350 = vector.load %arg1[%c31, %c0_108, %c0_109] : memref<40x4x256xf32, #tpu.memory_space<vmem>>, vector<1x4x256xf32>
    %351 = vector.shape_cast %350 : vector<1x4x256xf32> to vector<4x256xf32>
    %352 = vector.extract_strided_slice %254 {offsets = [0, 3, 0], sizes = [2, 1, 256], strides = [1, 1, 1]} : vector<2x4x256xf32> to vector<2x1x256xf32>
    %353 = vector.shape_cast %351 : vector<4x256xf32> to vector<1x4x256xf32>
    %354 = vector.broadcast %353 : vector<1x4x256xf32> to vector<2x4x256xf32>
    %355 = vector.broadcast %352 : vector<2x1x256xf32> to vector<2x4x256xf32>
    %356 = arith.mulf %354, %355 : vector<2x4x256xf32>
    %357 = arith.addf %349, %356 : vector<2x4x256xf32>
    %cst_110 = arith.constant 0.000000e+00 : f32
    %358 = vector.broadcast %cst_110 : f32 to vector<2x4x32xf32>
    %359 = vector.extract_strided_slice %254 {offsets = [0, 0, 32], sizes = [2, 4, 224], strides = [1, 1, 1]} : vector<2x4x256xf32> to vector<2x4x224xf32>
    %360 = tpu.concatenate %359, %358 in 2 : vector<2x4x224xf32>, vector<2x4x32xf32> -> vector<2x4x256xf32>
    %c32 = arith.constant 32 : index
    %c0_111 = arith.constant 0 : index
    %c0_112 = arith.constant 0 : index
    %361 = vector.load %arg1[%c32, %c0_111, %c0_112] : memref<40x4x256xf32, #tpu.memory_space<vmem>>, vector<1x4x256xf32>
    %362 = vector.shape_cast %361 : vector<1x4x256xf32> to vector<4x256xf32>
    %363 = vector.extract_strided_slice %360 {offsets = [0, 0, 0], sizes = [2, 1, 256], strides = [1, 1, 1]} : vector<2x4x256xf32> to vector<2x1x256xf32>
    %364 = vector.shape_cast %362 : vector<4x256xf32> to vector<1x4x256xf32>
    %365 = vector.broadcast %364 : vector<1x4x256xf32> to vector<2x4x256xf32>
    %366 = vector.broadcast %363 : vector<2x1x256xf32> to vector<2x4x256xf32>
    %367 = arith.mulf %365, %366 : vector<2x4x256xf32>
    %368 = arith.addf %357, %367 : vector<2x4x256xf32>
    %c33 = arith.constant 33 : index
    %c0_113 = arith.constant 0 : index
    %c0_114 = arith.constant 0 : index
    %369 = vector.load %arg1[%c33, %c0_113, %c0_114] : memref<40x4x256xf32, #tpu.memory_space<vmem>>, vector<1x4x256xf32>
    %370 = vector.shape_cast %369 : vector<1x4x256xf32> to vector<4x256xf32>
    %371 = vector.extract_strided_slice %360 {offsets = [0, 1, 0], sizes = [2, 1, 256], strides = [1, 1, 1]} : vector<2x4x256xf32> to vector<2x1x256xf32>
    %372 = vector.shape_cast %370 : vector<4x256xf32> to vector<1x4x256xf32>
    %373 = vector.broadcast %372 : vector<1x4x256xf32> to vector<2x4x256xf32>
    %374 = vector.broadcast %371 : vector<2x1x256xf32> to vector<2x4x256xf32>
    %375 = arith.mulf %373, %374 : vector<2x4x256xf32>
    %376 = arith.addf %368, %375 : vector<2x4x256xf32>
    %c34 = arith.constant 34 : index
    %c0_115 = arith.constant 0 : index
    %c0_116 = arith.constant 0 : index
    %377 = vector.load %arg1[%c34, %c0_115, %c0_116] : memref<40x4x256xf32, #tpu.memory_space<vmem>>, vector<1x4x256xf32>
    %378 = vector.shape_cast %377 : vector<1x4x256xf32> to vector<4x256xf32>
    %379 = vector.extract_strided_slice %360 {offsets = [0, 2, 0], sizes = [2, 1, 256], strides = [1, 1, 1]} : vector<2x4x256xf32> to vector<2x1x256xf32>
    %380 = vector.shape_cast %378 : vector<4x256xf32> to vector<1x4x256xf32>
    %381 = vector.broadcast %380 : vector<1x4x256xf32> to vector<2x4x256xf32>
    %382 = vector.broadcast %379 : vector<2x1x256xf32> to vector<2x4x256xf32>
    %383 = arith.mulf %381, %382 : vector<2x4x256xf32>
    %384 = arith.addf %376, %383 : vector<2x4x256xf32>
    %c35 = arith.constant 35 : index
    %c0_117 = arith.constant 0 : index
    %c0_118 = arith.constant 0 : index
    %385 = vector.load %arg1[%c35, %c0_117, %c0_118] : memref<40x4x256xf32, #tpu.memory_space<vmem>>, vector<1x4x256xf32>
    %386 = vector.shape_cast %385 : vector<1x4x256xf32> to vector<4x256xf32>
    %387 = vector.extract_strided_slice %360 {offsets = [0, 3, 0], sizes = [2, 1, 256], strides = [1, 1, 1]} : vector<2x4x256xf32> to vector<2x1x256xf32>
    %388 = vector.shape_cast %386 : vector<4x256xf32> to vector<1x4x256xf32>
    %389 = vector.broadcast %388 : vector<1x4x256xf32> to vector<2x4x256xf32>
    %390 = vector.broadcast %387 : vector<2x1x256xf32> to vector<2x4x256xf32>
    %391 = arith.mulf %389, %390 : vector<2x4x256xf32>
    %392 = arith.addf %384, %391 : vector<2x4x256xf32>
    %cst_119 = arith.constant 0.000000e+00 : f32
    %393 = vector.broadcast %cst_119 : f32 to vector<2x4x64xf32>
    %394 = vector.extract_strided_slice %254 {offsets = [0, 0, 64], sizes = [2, 4, 192], strides = [1, 1, 1]} : vector<2x4x256xf32> to vector<2x4x192xf32>
    %395 = tpu.concatenate %394, %393 in 2 : vector<2x4x192xf32>, vector<2x4x64xf32> -> vector<2x4x256xf32>
    %c36 = arith.constant 36 : index
    %c0_120 = arith.constant 0 : index
    %c0_121 = arith.constant 0 : index
    %396 = vector.load %arg1[%c36, %c0_120, %c0_121] : memref<40x4x256xf32, #tpu.memory_space<vmem>>, vector<1x4x256xf32>
    %397 = vector.shape_cast %396 : vector<1x4x256xf32> to vector<4x256xf32>
    %398 = vector.extract_strided_slice %395 {offsets = [0, 0, 0], sizes = [2, 1, 256], strides = [1, 1, 1]} : vector<2x4x256xf32> to vector<2x1x256xf32>
    %399 = vector.shape_cast %397 : vector<4x256xf32> to vector<1x4x256xf32>
    %400 = vector.broadcast %399 : vector<1x4x256xf32> to vector<2x4x256xf32>
    %401 = vector.broadcast %398 : vector<2x1x256xf32> to vector<2x4x256xf32>
    %402 = arith.mulf %400, %401 : vector<2x4x256xf32>
    %403 = arith.addf %392, %402 : vector<2x4x256xf32>
    %c37 = arith.constant 37 : index
    %c0_122 = arith.constant 0 : index
    %c0_123 = arith.constant 0 : index
    %404 = vector.load %arg1[%c37, %c0_122, %c0_123] : memref<40x4x256xf32, #tpu.memory_space<vmem>>, vector<1x4x256xf32>
    %405 = vector.shape_cast %404 : vector<1x4x256xf32> to vector<4x256xf32>
    %406 = vector.extract_strided_slice %395 {offsets = [0, 1, 0], sizes = [2, 1, 256], strides = [1, 1, 1]} : vector<2x4x256xf32> to vector<2x1x256xf32>
    %407 = vector.shape_cast %405 : vector<4x256xf32> to vector<1x4x256xf32>
    %408 = vector.broadcast %407 : vector<1x4x256xf32> to vector<2x4x256xf32>
    %409 = vector.broadcast %406 : vector<2x1x256xf32> to vector<2x4x256xf32>
    %410 = arith.mulf %408, %409 : vector<2x4x256xf32>
    %411 = arith.addf %403, %410 : vector<2x4x256xf32>
    %c38 = arith.constant 38 : index
    %c0_124 = arith.constant 0 : index
    %c0_125 = arith.constant 0 : index
    %412 = vector.load %arg1[%c38, %c0_124, %c0_125] : memref<40x4x256xf32, #tpu.memory_space<vmem>>, vector<1x4x256xf32>
    %413 = vector.shape_cast %412 : vector<1x4x256xf32> to vector<4x256xf32>
    %414 = vector.extract_strided_slice %395 {offsets = [0, 2, 0], sizes = [2, 1, 256], strides = [1, 1, 1]} : vector<2x4x256xf32> to vector<2x1x256xf32>
    %415 = vector.shape_cast %413 : vector<4x256xf32> to vector<1x4x256xf32>
    %416 = vector.broadcast %415 : vector<1x4x256xf32> to vector<2x4x256xf32>
    %417 = vector.broadcast %414 : vector<2x1x256xf32> to vector<2x4x256xf32>
    %418 = arith.mulf %416, %417 : vector<2x4x256xf32>
    %419 = arith.addf %411, %418 : vector<2x4x256xf32>
    %c39 = arith.constant 39 : index
    %c0_126 = arith.constant 0 : index
    %c0_127 = arith.constant 0 : index
    %420 = vector.load %arg1[%c39, %c0_126, %c0_127] : memref<40x4x256xf32, #tpu.memory_space<vmem>>, vector<1x4x256xf32>
    %421 = vector.shape_cast %420 : vector<1x4x256xf32> to vector<4x256xf32>
    %422 = vector.extract_strided_slice %395 {offsets = [0, 3, 0], sizes = [2, 1, 256], strides = [1, 1, 1]} : vector<2x4x256xf32> to vector<2x1x256xf32>
    %423 = vector.shape_cast %421 : vector<4x256xf32> to vector<1x4x256xf32>
    %424 = vector.broadcast %423 : vector<1x4x256xf32> to vector<2x4x256xf32>
    %425 = vector.broadcast %422 : vector<2x1x256xf32> to vector<2x4x256xf32>
    %426 = arith.mulf %424, %425 : vector<2x4x256xf32>
    %427 = arith.addf %419, %426 : vector<2x4x256xf32>
    %cst_128 = arith.constant 0.000000e+00 : f32
    %428 = vector.broadcast %cst_128 : f32 to vector<2x4x256xf32>
    %c5_129 = arith.constant 5 : index
    %c0_130 = arith.constant 0 : index
    %c0_131 = arith.constant 0 : index
    %429 = vector.load %arg2[%c5_129, %c0_130, %c0_131] : memref<10x4x256xf32, #tpu.memory_space<vmem>>, vector<1x4x256xf32>
    %430 = vector.shape_cast %429 : vector<1x4x256xf32> to vector<4x256xf32>
    %cst_132 = arith.constant 0.000000e+00 : f32
    %431 = vector.broadcast %cst_132 : f32 to vector<2x4x2xf32>
    %432 = vector.extract_strided_slice %427 {offsets = [0, 0, 0], sizes = [2, 4, 254], strides = [1, 1, 1]} : vector<2x4x256xf32> to vector<2x4x254xf32>
    %433 = tpu.concatenate %431, %432 in 2 : vector<2x4x2xf32>, vector<2x4x254xf32> -> vector<2x4x256xf32>
    %434 = vector.shape_cast %430 : vector<4x256xf32> to vector<1x4x256xf32>
    %435 = vector.broadcast %434 : vector<1x4x256xf32> to vector<2x4x256xf32>
    %436 = arith.mulf %435, %433 : vector<2x4x256xf32>
    %437 = arith.addf %428, %436 : vector<2x4x256xf32>
    %c6_133 = arith.constant 6 : index
    %c0_134 = arith.constant 0 : index
    %c0_135 = arith.constant 0 : index
    %438 = vector.load %arg2[%c6_133, %c0_134, %c0_135] : memref<10x4x256xf32, #tpu.memory_space<vmem>>, vector<1x4x256xf32>
    %439 = vector.shape_cast %438 : vector<1x4x256xf32> to vector<4x256xf32>
    %cst_136 = arith.constant 0.000000e+00 : f32
    %440 = vector.broadcast %cst_136 : f32 to vector<2x4x1xf32>
    %441 = vector.extract_strided_slice %427 {offsets = [0, 0, 0], sizes = [2, 4, 255], strides = [1, 1, 1]} : vector<2x4x256xf32> to vector<2x4x255xf32>
    %442 = tpu.concatenate %440, %441 in 2 : vector<2x4x1xf32>, vector<2x4x255xf32> -> vector<2x4x256xf32>
    %443 = vector.shape_cast %439 : vector<4x256xf32> to vector<1x4x256xf32>
    %444 = vector.broadcast %443 : vector<1x4x256xf32> to vector<2x4x256xf32>
    %445 = arith.mulf %444, %442 : vector<2x4x256xf32>
    %446 = arith.addf %437, %445 : vector<2x4x256xf32>
    %c7_137 = arith.constant 7 : index
    %c0_138 = arith.constant 0 : index
    %c0_139 = arith.constant 0 : index
    %447 = vector.load %arg2[%c7_137, %c0_138, %c0_139] : memref<10x4x256xf32, #tpu.memory_space<vmem>>, vector<1x4x256xf32>
    %448 = vector.shape_cast %447 : vector<1x4x256xf32> to vector<4x256xf32>
    %449 = vector.shape_cast %448 : vector<4x256xf32> to vector<1x4x256xf32>
    %450 = vector.broadcast %449 : vector<1x4x256xf32> to vector<2x4x256xf32>
    %451 = arith.mulf %450, %427 : vector<2x4x256xf32>
    %452 = arith.addf %446, %451 : vector<2x4x256xf32>
    %c8_140 = arith.constant 8 : index
    %c0_141 = arith.constant 0 : index
    %c0_142 = arith.constant 0 : index
    %453 = vector.load %arg2[%c8_140, %c0_141, %c0_142] : memref<10x4x256xf32, #tpu.memory_space<vmem>>, vector<1x4x256xf32>
    %454 = vector.shape_cast %453 : vector<1x4x256xf32> to vector<4x256xf32>
    %cst_143 = arith.constant 0.000000e+00 : f32
    %455 = vector.broadcast %cst_143 : f32 to vector<2x4x1xf32>
    %456 = vector.extract_strided_slice %427 {offsets = [0, 0, 1], sizes = [2, 4, 255], strides = [1, 1, 1]} : vector<2x4x256xf32> to vector<2x4x255xf32>
    %457 = tpu.concatenate %456, %455 in 2 : vector<2x4x255xf32>, vector<2x4x1xf32> -> vector<2x4x256xf32>
    %458 = vector.shape_cast %454 : vector<4x256xf32> to vector<1x4x256xf32>
    %459 = vector.broadcast %458 : vector<1x4x256xf32> to vector<2x4x256xf32>
    %460 = arith.mulf %459, %457 : vector<2x4x256xf32>
    %461 = arith.addf %452, %460 : vector<2x4x256xf32>
    %c9_144 = arith.constant 9 : index
    %c0_145 = arith.constant 0 : index
    %c0_146 = arith.constant 0 : index
    %462 = vector.load %arg2[%c9_144, %c0_145, %c0_146] : memref<10x4x256xf32, #tpu.memory_space<vmem>>, vector<1x4x256xf32>
    %463 = vector.shape_cast %462 : vector<1x4x256xf32> to vector<4x256xf32>
    %cst_147 = arith.constant 0.000000e+00 : f32
    %464 = vector.broadcast %cst_147 : f32 to vector<2x4x2xf32>
    %465 = vector.extract_strided_slice %427 {offsets = [0, 0, 2], sizes = [2, 4, 254], strides = [1, 1, 1]} : vector<2x4x256xf32> to vector<2x4x254xf32>
    %466 = tpu.concatenate %465, %464 in 2 : vector<2x4x254xf32>, vector<2x4x2xf32> -> vector<2x4x256xf32>
    %467 = vector.shape_cast %463 : vector<4x256xf32> to vector<1x4x256xf32>
    %468 = vector.broadcast %467 : vector<1x4x256xf32> to vector<2x4x256xf32>
    %469 = arith.mulf %468, %466 : vector<2x4x256xf32>
    %470 = arith.addf %461, %469 : vector<2x4x256xf32>
    %cst_148 = arith.constant dense<0.000000e+00> : vector<4xf32>
    %471 = vector.multi_reduction <add>, %470, %cst_148 [0, 2] : vector<2x4x256xf32> to vector<4xf32>
    %472 = vector.shape_cast %471 : vector<4xf32> to vector<1x4x1xf32>
    %473 = arith.mulf %470, %470 : vector<2x4x256xf32>
    %cst_149 = arith.constant dense<0.000000e+00> : vector<4xf32>
    %474 = vector.multi_reduction <add>, %473, %cst_149 [0, 2] : vector<2x4x256xf32> to vector<4xf32>
    %475 = vector.shape_cast %474 : vector<4xf32> to vector<1x4x1xf32>
    %cst_150 = arith.constant 0.001953125 : f32
    %476 = vector.broadcast %cst_150 : f32 to vector<1x4x1xf32>
    %477 = arith.mulf %472, %476 : vector<1x4x1xf32>
    %cst_151 = arith.constant 0.001953125 : f32
    %478 = vector.broadcast %cst_151 : f32 to vector<1x4x1xf32>
    %479 = arith.mulf %475, %478 : vector<1x4x1xf32>
    %480 = arith.mulf %477, %477 : vector<1x4x1xf32>
    %481 = arith.subf %479, %480 : vector<1x4x1xf32>
    %cst_152 = arith.constant 0.000000e+00 : f32
    %482 = vector.broadcast %cst_152 : f32 to vector<1x4x1xf32>
    %483 = arith.maximumf %481, %482 : vector<1x4x1xf32>
    %c4_153 = arith.constant 4 : index
    %c0_154 = arith.constant 0 : index
    %c0_155 = arith.constant 0 : index
    %484 = vector.load %arg3[%c4_153, %c0_154, %c0_155] : memref<8x4x1xf32, #tpu.memory_space<vmem>>, vector<1x4x1xf32>
    %485 = vector.shape_cast %484 : vector<1x4x1xf32> to vector<4x1xf32>
    %c6_156 = arith.constant 6 : index
    %c0_157 = arith.constant 0 : index
    %c0_158 = arith.constant 0 : index
    %486 = vector.load %arg3[%c6_156, %c0_157, %c0_158] : memref<8x4x1xf32, #tpu.memory_space<vmem>>, vector<1x4x1xf32>
    %487 = vector.shape_cast %486 : vector<1x4x1xf32> to vector<4x1xf32>
    %c7_159 = arith.constant 7 : index
    %c0_160 = arith.constant 0 : index
    %c0_161 = arith.constant 0 : index
    %488 = vector.load %arg3[%c7_159, %c0_160, %c0_161] : memref<8x4x1xf32, #tpu.memory_space<vmem>>, vector<1x4x1xf32>
    %489 = vector.shape_cast %488 : vector<1x4x1xf32> to vector<4x1xf32>
    %490 = arith.mulf %485, %487 : vector<4x1xf32>
    %491 = arith.mulf %485, %485 : vector<4x1xf32>
    %492 = vector.shape_cast %491 : vector<4x1xf32> to vector<1x4x1xf32>
    %493 = arith.mulf %492, %483 : vector<1x4x1xf32>
    %cst_162 = arith.constant 9.99999974E-6 : f32
    %494 = vector.broadcast %cst_162 : f32 to vector<1x4x1xf32>
    %495 = arith.addf %493, %494 : vector<1x4x1xf32>
    %496 = math.rsqrt %495 : vector<1x4x1xf32>
    %497 = vector.shape_cast %490 : vector<4x1xf32> to vector<1x4x1xf32>
    %498 = arith.mulf %497, %496 : vector<1x4x1xf32>
    %499 = arith.mulf %498, %477 : vector<1x4x1xf32>
    %500 = vector.shape_cast %489 : vector<4x1xf32> to vector<1x4x1xf32>
    %501 = arith.subf %500, %499 : vector<1x4x1xf32>
    %502 = vector.broadcast %498 : vector<1x4x1xf32> to vector<2x4x256xf32>
    %503 = arith.mulf %470, %502 : vector<2x4x256xf32>
    %504 = vector.broadcast %501 : vector<1x4x1xf32> to vector<2x4x256xf32>
    %505 = arith.addf %503, %504 : vector<2x4x256xf32>
    %506 = arith.addf %505, %0 : vector<2x4x256xf32>
    %cst_163 = arith.constant 0.00999999977 : f32
    %507 = vector.broadcast %cst_163 : f32 to vector<2x4x256xf32>
    %508 = arith.mulf %507, %506 : vector<2x4x256xf32>
    %509 = arith.maximumf %506, %508 : vector<2x4x256xf32>
    %c0_164 = arith.constant 0 : index
    %c0_165 = arith.constant 0 : index
    %c0_166 = arith.constant 0 : index
    %510 = vector.load %arg4[%c0_164, %c0_165, %c0_166] : memref<2x4x256xf32, #tpu.memory_space<vmem>>, vector<2x4x256xf32>
    tpu.vector_store %arg4[%c0_164, %c0_165, %c0_166], %509 {strides = array<i32>} : memref<2x4x256xf32, #tpu.memory_space<vmem>>, vector<2x4x256xf32>,
    return
  }
}

</mosaic_0001>

<llo_original>
// kernel: residual_block.1
$region0: #{residual_block.1}
  #allocation0 [shape = 'u32[]', space=smem, size = 0x4, offset = 0x4, fixed_abs, tag = 'smem constant byte address 0x4 - core index']
  #allocation1 [shape = 'u32[144,128]{1,0:T(1,128)}', space=vmem, size = 0x12000, scoped, tag = 'internal scratch']
  %s0 = inlined_call_operand.vmem [shape: f32[2,4,256], index: 0, kind: input, shape index: {}]
  %s1 = inlined_call_operand.vmem [shape: f32[40,4,256], index: 1, kind: input, shape index: {}]
  %s2 = inlined_call_operand.vmem [shape: f32[10,4,256], index: 2, kind: input, shape index: {}]
  %s3 = inlined_call_operand.vmem [shape: f32[8,4,1], index: 3, kind: input, shape index: {}]
  %s4 = inlined_call_operand.vmem [shape: f32[2,4,256], index: 4, kind: output, shape index: {}]
  %s5 = sld [smem:[#allocation0]]
  $region26: #{residual_block.1} parent=0
    _
  %s7 = ssub.s32 1, %s5
  %s8 = scalar_select 0, %s7, %s5
  // Predicated region
  $region2: #{residual_block.1} parent=0 // pred_check
    _
  $region3: #{residual_block.1} parent=0 // pred_check_branch
    %10 = sbr.rel (0) target = $region5
  $region4: #{residual_block.1} parent=0 // pred_region
    _
  $region5: #{residual_block.1} parent=0 // pred_fallthru
    _
  // Predicated region
  $region6: #{residual_block.1} parent=0 // pred_check
    _
  $region7: #{residual_block.1} parent=0 // pred_check_branch
    %12 = sbr.rel (0) target = $region9
  $region8: #{residual_block.1} parent=0 // pred_region
    _
  $region9: #{residual_block.1} parent=0 // pred_fallthru
    _
  // Predicated region
  $region10: #{residual_block.1} parent=0 // pred_check
    _
  $region11: #{residual_block.1} parent=0 // pred_check_branch
    %14 = sbr.rel (0) target = $region13
  $region12: #{residual_block.1} parent=0 // pred_region
    _
  $region13: #{residual_block.1} parent=0 // pred_fallthru
    _
  // Predicated region
  $region14: #{residual_block.1} parent=0 // pred_check
    _
  $region15: #{residual_block.1} parent=0 // pred_check_branch
    %16 = sbr.rel (0) target = $region17
  $region16: #{residual_block.1} parent=0 // pred_region
    _
  $region17: #{residual_block.1} parent=0 // pred_fallthru
    _
  %v17 = vld [vmem:[%s0] sm:$0xff]
  %v18 = vld [vmem:[%s0 + $0x8] sm:$0xff]
  %v21 = vcombine.high %v17, %v17
  %v22 = vcombine.high %v18, %v18
  %23 = vrot.lane.b32.xlu0 %v17, 64
  %v24 = vpop.permute.xlu0 %23
  %25 = vrot.lane.b32.xlu0 %v21, 64
  %v26 = vpop.permute.xlu0 %25
  %27 = vrot.lane.b32.xlu0 %v18, 64
  %v28 = vpop.permute.xlu0 %27
  %29 = vrot.lane.b32.xlu0 %v22, 64
  %v30 = vpop.permute.xlu0 %29
  %vm31 = vcmask 523264
  %v32 = vsel %vm31, %v24, %v26
  %v33 = vsel %vm31, %v28, %v30
  %v38 = vsel %vm31, 0.0, %v24
  %v39 = vsel %vm31, 0.0, %v28
  %v40 = vld [vmem:[%s1] sm:$0xff]
  %v41 = vlaneseq
  %v42 = vshrl.u32 %v41, 7
  %v43 = vsub.s32 0, %v42
  %v44 = vrot.slane %v38, %v43
  %v45 = vlaneseq
  %v46 = vshrl.u32 %v45, 7
  %v47 = vsub.s32 0, %v46
  %v48 = vrot.slane %v32, %v47
  %v49 = vlaneseq
  %v50 = vshrl.u32 %v49, 7
  %v51 = vsub.s32 0, %v50
  %v52 = vrot.slane %v39, %v51
  %v53 = vlaneseq
  %v54 = vshrl.u32 %v53, 7
  %v55 = vsub.s32 0, %v54
  %v56 = vrot.slane %v33, %v55
  %v61 = vcombine.low %v44, %v48
  %v62 = vcombine.low %v52, %v56
  %v65 = vmul.f32 %v40, %v61
  %v66 = vmul.f32 %v40, %v62
  %v67 = vadd.f32 %v65, 0.0
  %v68 = vadd.f32 %v66, 0.0
  %s69 = scalar_lea.vmem %s1, 8
  %v70 = vld [vmem:[%s69] sm:$0xff]
  %v71 = vlaneseq
  %v72 = vshrl.u32 %v71, 7
  %v73 = vsub.s32 1, %v72
  %v74 = vrot.slane %v38, %v73
  %v75 = vlaneseq
  %v76 = vshrl.u32 %v75, 7
  %v77 = vsub.s32 1, %v76
  %v78 = vrot.slane %v32, %v77
  %v79 = vlaneseq
  %v80 = vshrl.u32 %v79, 7
  %v81 = vsub.s32 1, %v80
  %v82 = vrot.slane %v39, %v81
  %v83 = vlaneseq
  %v84 = vshrl.u32 %v83, 7
  %v85 = vsub.s32 1, %v84
  %v86 = vrot.slane %v33, %v85
  %v91 = vcombine.low %v74, %v78
  %v92 = vcombine.low %v82, %v86
  %v95 = vmul.f32 %v70, %v91
  %v96 = vmul.f32 %v70, %v92
  %v97 = vadd.f32 %v67, %v95
  %v98 = vadd.f32 %v68, %v96
  %s99 = scalar_lea.vmem %s1, 16
  %v100 = vld [vmem:[%s99] sm:$0xff]
  %v101 = vlaneseq
  %v102 = vshrl.u32 %v101, 7
  %v103 = vsub.s32 2, %v102
  %v104 = vrot.slane %v38, %v103
  %v105 = vlaneseq
  %v106 = vshrl.u32 %v105, 7
  %v107 = vsub.s32 2, %v106
  %v108 = vrot.slane %v32, %v107
  %v109 = vlaneseq
  %v110 = vshrl.u32 %v109, 7
  %v111 = vsub.s32 2, %v110
  %v112 = vrot.slane %v39, %v111
  %v113 = vlaneseq
  %v114 = vshrl.u32 %v113, 7
  %v115 = vsub.s32 2, %v114
  %v116 = vrot.slane %v33, %v115
  %v121 = vcombine.low %v104, %v108
  %v122 = vcombine.low %v112, %v116
  %v125 = vmul.f32 %v100, %v121
  %v126 = vmul.f32 %v100, %v122
  %v127 = vadd.f32 %v97, %v125
  %v128 = vadd.f32 %v98, %v126
  %s129 = scalar_lea.vmem %s1, 24
  %v130 = vld [vmem:[%s129] sm:$0xff]
  %v131 = vlaneseq
  %v132 = vshrl.u32 %v131, 7
  %v133 = vsub.s32 3, %v132
  %v134 = vrot.slane %v38, %v133
  %v135 = vlaneseq
  %v136 = vshrl.u32 %v135, 7
  %v137 = vsub.s32 3, %v136
  %v138 = vrot.slane %v32, %v137
  %v139 = vlaneseq
  %v140 = vshrl.u32 %v139, 7
  %v141 = vsub.s32 3, %v140
  %v142 = vrot.slane %v39, %v141
  %v143 = vlaneseq
  %v144 = vshrl.u32 %v143, 7
  %v145 = vsub.s32 3, %v144
  %v146 = vrot.slane %v33, %v145
  %v151 = vcombine.low %v134, %v138
  %v152 = vcombine.low %v142, %v146
  %v155 = vmul.f32 %v130, %v151
  %v156 = vmul.f32 %v130, %v152
  %v157 = vadd.f32 %v127, %v155
  %v158 = vadd.f32 %v128, %v156
  %159 = vrot.lane.b32.xlu0 %v17, 32
  %v160 = vpop.permute.xlu0 %159
  %161 = vrot.lane.b32.xlu0 %v21, 32
  %v162 = vpop.permute.xlu0 %161
  %163 = vrot.lane.b32.xlu0 %v18, 32
  %v164 = vpop.permute.xlu0 %163
  %165 = vrot.lane.b32.xlu0 %v22, 32
  %v166 = vpop.permute.xlu0 %165
  %vm167 = vcmask 261120
  %v168 = vsel %vm167, %v160, %v162
  %v169 = vsel %vm167, %v164, %v166
  %v174 = vsel %vm167, 0.0, %v160
  %v175 = vsel %vm167, 0.0, %v164
  %s176 = scalar_lea.vmem %s1, 32
  %v177 = vld [vmem:[%s176] sm:$0xff]
  %v178 = vlaneseq
  %v179 = vshrl.u32 %v178, 7
  %v180 = vsub.s32 0, %v179
  %v181 = vrot.slane %v174, %v180
  %v182 = vlaneseq
  %v183 = vshrl.u32 %v182, 7
  %v184 = vsub.s32 0, %v183
  %v185 = vrot.slane %v168, %v184
  %v186 = vlaneseq
  %v187 = vshrl.u32 %v186, 7
  %v188 = vsub.s32 0, %v187
  %v189 = vrot.slane %v175, %v188
  %v190 = vlaneseq
  %v191 = vshrl.u32 %v190, 7
  %v192 = vsub.s32 0, %v191
  %v193 = vrot.slane %v169, %v192
  %v198 = vcombine.low %v181, %v185
  %v199 = vcombine.low %v189, %v193
  %v202 = vmul.f32 %v177, %v198
  %v203 = vmul.f32 %v177, %v199
  %v204 = vadd.f32 %v157, %v202
  %v205 = vadd.f32 %v158, %v203
  %s206 = scalar_lea.vmem %s1, 40
  %v207 = vld [vmem:[%s206] sm:$0xff]
  %v208 = vlaneseq
  %v209 = vshrl.u32 %v208, 7
  %v210 = vsub.s32 1, %v209
  %v211 = vrot.slane %v174, %v210
  %v212 = vlaneseq
  %v213 = vshrl.u32 %v212, 7
  %v214 = vsub.s32 1, %v213
  %v215 = vrot.slane %v168, %v214
  %v216 = vlaneseq
  %v217 = vshrl.u32 %v216, 7
  %v218 = vsub.s32 1, %v217
  %v219 = vrot.slane %v175, %v218
  %v220 = vlaneseq
  %v221 = vshrl.u32 %v220, 7
  %v222 = vsub.s32 1, %v221
  %v223 = vrot.slane %v169, %v222
  %v228 = vcombine.low %v211, %v215
  %v229 = vcombine.low %v219, %v223
  %v232 = vmul.f32 %v207, %v228
  %v233 = vmul.f32 %v207, %v229
  %v234 = vadd.f32 %v204, %v232
  %v235 = vadd.f32 %v205, %v233
  %s236 = scalar_lea.vmem %s1, 48
  %v237 = vld [vmem:[%s236] sm:$0xff]
  %v238 = vlaneseq
  %v239 = vshrl.u32 %v238, 7
  %v240 = vsub.s32 2, %v239
  %v241 = vrot.slane %v174, %v240
  %v242 = vlaneseq
  %v243 = vshrl.u32 %v242, 7
  %v244 = vsub.s32 2, %v243
  %v245 = vrot.slane %v168, %v244
  %v246 = vlaneseq
  %v247 = vshrl.u32 %v246, 7
  %v248 = vsub.s32 2, %v247
  %v249 = vrot.slane %v175, %v248
  %v250 = vlaneseq
  %v251 = vshrl.u32 %v250, 7
  %v252 = vsub.s32 2, %v251
  %v253 = vrot.slane %v169, %v252
  %v258 = vcombine.low %v241, %v245
  %v259 = vcombine.low %v249, %v253
  %v262 = vmul.f32 %v237, %v258
  %v263 = vmul.f32 %v237, %v259
  %v264 = vadd.f32 %v234, %v262
  %v265 = vadd.f32 %v235, %v263
  %s266 = scalar_lea.vmem %s1, 56
  %v267 = vld [vmem:[%s266] sm:$0xff]
  %v268 = vlaneseq
  %v269 = vshrl.u32 %v268, 7
  %v270 = vsub.s32 3, %v269
  %v271 = vrot.slane %v174, %v270
  %v272 = vlaneseq
  %v273 = vshrl.u32 %v272, 7
  %v274 = vsub.s32 3, %v273
  %v275 = vrot.slane %v168, %v274
  %v276 = vlaneseq
  %v277 = vshrl.u32 %v276, 7
  %v278 = vsub.s32 3, %v277
  %v279 = vrot.slane %v175, %v278
  %v280 = vlaneseq
  %v281 = vshrl.u32 %v280, 7
  %v282 = vsub.s32 3, %v281
  %v283 = vrot.slane %v169, %v282
  %v288 = vcombine.low %v271, %v275
  %v289 = vcombine.low %v279, %v283
  %v292 = vmul.f32 %v267, %v288
  %v293 = vmul.f32 %v267, %v289
  %v294 = vadd.f32 %v264, %v292
  %v295 = vadd.f32 %v265, %v293
  %s296 = scalar_lea.vmem %s1, 64
  %v297 = vld [vmem:[%s296] sm:$0xff]
  %v298 = vlaneseq
  %v299 = vshrl.u32 %v298, 7
  %v300 = vsub.s32 0, %v299
  %v301 = vrot.slane %v17, %v300
  %v302 = vlaneseq
  %v303 = vshrl.u32 %v302, 7
  %v304 = vsub.s32 4, %v303
  %v305 = vrot.slane %v17, %v304
  %v306 = vlaneseq
  %v307 = vshrl.u32 %v306, 7
  %v308 = vsub.s32 0, %v307
  %v309 = vrot.slane %v18, %v308
  %v310 = vlaneseq
  %v311 = vshrl.u32 %v310, 7
  %v312 = vsub.s32 4, %v311
  %v313 = vrot.slane %v18, %v312
  %v318 = vlaneseq
  %v319 = vshrl.u32 %v318, 7
  %v320 = vsub.s32 0, %v319
  %v321 = vrot.slane %v301, %v320
  %v322 = vlaneseq
  %v323 = vshrl.u32 %v322, 7
  %v324 = vsub.s32 0, %v323
  %v325 = vrot.slane %v305, %v324
  %v326 = vlaneseq
  %v327 = vshrl.u32 %v326, 7
  %v328 = vsub.s32 0, %v327
  %v329 = vrot.slane %v309, %v328
  %v330 = vlaneseq
  %v331 = vshrl.u32 %v330, 7
  %v332 = vsub.s32 0, %v331
  %v333 = vrot.slane %v313, %v332
  %v338 = vcombine.low %v321, %v325
  %v339 = vcombine.low %v329, %v333
  %v342 = vmul.f32 %v297, %v338
  %v343 = vmul.f32 %v297, %v339
  %v344 = vadd.f32 %v294, %v342
  %v345 = vadd.f32 %v295, %v343
  %s346 = scalar_lea.vmem %s1, 72
  %v347 = vld [vmem:[%s346] sm:$0xff]
  %v348 = vlaneseq
  %v349 = vshrl.u32 %v348, 7
  %v350 = vsub.s32 1, %v349
  %v351 = vrot.slane %v17, %v350
  %v352 = vlaneseq
  %v353 = vshrl.u32 %v352, 7
  %v354 = vsub.s32 5, %v353
  %v355 = vrot.slane %v17, %v354
  %v356 = vlaneseq
  %v357 = vshrl.u32 %v356, 7
  %v358 = vsub.s32 1, %v357
  %v359 = vrot.slane %v18, %v358
  %v360 = vlaneseq
  %v361 = vshrl.u32 %v360, 7
  %v362 = vsub.s32 5, %v361
  %v363 = vrot.slane %v18, %v362
  %v368 = vlaneseq
  %v369 = vshrl.u32 %v368, 7
  %v370 = vsub.s32 1, %v369
  %v371 = vrot.slane %v351, %v370
  %v372 = vlaneseq
  %v373 = vshrl.u32 %v372, 7
  %v374 = vsub.s32 1, %v373
  %v375 = vrot.slane %v355, %v374
  %v376 = vlaneseq
  %v377 = vshrl.u32 %v376, 7
  %v378 = vsub.s32 1, %v377
  %v379 = vrot.slane %v359, %v378
  %v380 = vlaneseq
  %v381 = vshrl.u32 %v380, 7
  %v382 = vsub.s32 1, %v381
  %v383 = vrot.slane %v363, %v382
  %v388 = vcombine.low %v371, %v375
  %v389 = vcombine.low %v379, %v383
  %v392 = vmul.f32 %v347, %v388
  %v393 = vmul.f32 %v347, %v389
  %v394 = vadd.f32 %v344, %v392
  %v395 = vadd.f32 %v345, %v393
  %s396 = scalar_lea.vmem %s1, 80
  %v397 = vld [vmem:[%s396] sm:$0xff]
  %v398 = vlaneseq
  %v399 = vshrl.u32 %v398, 7
  %v400 = vsub.s32 2, %v399
  %v401 = vrot.slane %v17, %v400
  %v402 = vlaneseq
  %v403 = vshrl.u32 %v402, 7
  %v404 = vsub.s32 6, %v403
  %v405 = vrot.slane %v17, %v404
  %v406 = vlaneseq
  %v407 = vshrl.u32 %v406, 7
  %v408 = vsub.s32 2, %v407
  %v409 = vrot.slane %v18, %v408
  %v410 = vlaneseq
  %v411 = vshrl.u32 %v410, 7
  %v412 = vsub.s32 6, %v411
  %v413 = vrot.slane %v18, %v412
  %v418 = vlaneseq
  %v419 = vshrl.u32 %v418, 7
  %v420 = vsub.s32 2, %v419
  %v421 = vrot.slane %v401, %v420
  %v422 = vlaneseq
  %v423 = vshrl.u32 %v422, 7
  %v424 = vsub.s32 2, %v423
  %v425 = vrot.slane %v405, %v424
  %v426 = vlaneseq
  %v427 = vshrl.u32 %v426, 7
  %v428 = vsub.s32 2, %v427
  %v429 = vrot.slane %v409, %v428
  %v430 = vlaneseq
  %v431 = vshrl.u32 %v430, 7
  %v432 = vsub.s32 2, %v431
  %v433 = vrot.slane %v413, %v432
  %v438 = vcombine.low %v421, %v425
  %v439 = vcombine.low %v429, %v433
  %v442 = vmul.f32 %v397, %v438
  %v443 = vmul.f32 %v397, %v439
  %v444 = vadd.f32 %v394, %v442
  %v445 = vadd.f32 %v395, %v443
  %s446 = scalar_lea.vmem %s1, 88
  %v447 = vld [vmem:[%s446] sm:$0xff]
  %v448 = vlaneseq
  %v449 = vshrl.u32 %v448, 7
  %v450 = vsub.s32 3, %v449
  %v451 = vrot.slane %v17, %v450
  %v452 = vlaneseq
  %v453 = vshrl.u32 %v452, 7
  %v454 = vsub.s32 7, %v453
  %v455 = vrot.slane %v17, %v454
  %v456 = vlaneseq
  %v457 = vshrl.u32 %v456, 7
  %v458 = vsub.s32 3, %v457
  %v459 = vrot.slane %v18, %v458
  %v460 = vlaneseq
  %v461 = vshrl.u32 %v460, 7
  %v462 = vsub.s32 7, %v461
  %v463 = vrot.slane %v18, %v462
  %v468 = vlaneseq
  %v469 = vshrl.u32 %v468, 7
  %v470 = vsub.s32 3, %v469
  %v471 = vrot.slane %v451, %v470
  %v472 = vlaneseq
  %v473 = vshrl.u32 %v472, 7
  %v474 = vsub.s32 3, %v473
  %v475 = vrot.slane %v455, %v474
  %v476 = vlaneseq
  %v477 = vshrl.u32 %v476, 7
  %v478 = vsub.s32 3, %v477
  %v479 = vrot.slane %v459, %v478
  %v480 = vlaneseq
  %v481 = vshrl.u32 %v480, 7
  %v482 = vsub.s32 3, %v481
  %v483 = vrot.slane %v463, %v482
  %v488 = vcombine.low %v471, %v475
  %v489 = vcombine.low %v479, %v483
  %v492 = vmul.f32 %v447, %v488
  %v493 = vmul.f32 %v447, %v489
  %v494 = vadd.f32 %v444, %v492
  %v495 = vadd.f32 %v445, %v493
  %496 = vrot.lane.b32.xlu0 %v17, 96
  %v497 = vpop.permute.xlu0 %496
  %498 = vrot.lane.b32.xlu0 %v21, 96
  %v499 = vpop.permute.xlu0 %498
  %500 = vrot.lane.b32.xlu0 %v18, 96
  %v501 = vpop.permute.xlu0 %500
  %502 = vrot.lane.b32.xlu0 %v22, 96
  %v503 = vpop.permute.xlu0 %502
  %vm504 = vcmask 785408
  %v505 = vsel %vm504, %v497, %v499
  %v506 = vsel %vm504, %v501, %v503
  %v511 = vsel %vm504, %v499, 0.0
  %v512 = vsel %vm504, %v503, 0.0
  %s513 = scalar_lea.vmem %s1, 96
  %v514 = vld [vmem:[%s513] sm:$0xff]
  %v515 = vlaneseq
  %v516 = vshrl.u32 %v515, 7
  %v517 = vsub.s32 0, %v516
  %v518 = vrot.slane %v505, %v517
  %v519 = vlaneseq
  %v520 = vshrl.u32 %v519, 7
  %v521 = vsub.s32 0, %v520
  %v522 = vrot.slane %v511, %v521
  %v523 = vlaneseq
  %v524 = vshrl.u32 %v523, 7
  %v525 = vsub.s32 0, %v524
  %v526 = vrot.slane %v506, %v525
  %v527 = vlaneseq
  %v528 = vshrl.u32 %v527, 7
  %v529 = vsub.s32 0, %v528
  %v530 = vrot.slane %v512, %v529
  %v535 = vcombine.low %v518, %v522
  %v536 = vcombine.low %v526, %v530
  %v539 = vmul.f32 %v514, %v535
  %v540 = vmul.f32 %v514, %v536
  %v541 = vadd.f32 %v494, %v539
  %v542 = vadd.f32 %v495, %v540
  %s543 = scalar_lea.vmem %s1, 104
  %v544 = vld [vmem:[%s543] sm:$0xff]
  %v545 = vlaneseq
  %v546 = vshrl.u32 %v545, 7
  %v547 = vsub.s32 1, %v546
  %v548 = vrot.slane %v505, %v547
  %v549 = vlaneseq
  %v550 = vshrl.u32 %v549, 7
  %v551 = vsub.s32 1, %v550
  %v552 = vrot.slane %v511, %v551
  %v553 = vlaneseq
  %v554 = vshrl.u32 %v553, 7
  %v555 = vsub.s32 1, %v554
  %v556 = vrot.slane %v506, %v555
  %v557 = vlaneseq
  %v558 = vshrl.u32 %v557, 7
  %v559 = vsub.s32 1, %v558
  %v560 = vrot.slane %v512, %v559
  %v565 = vcombine.low %v548, %v552
  %v566 = vcombine.low %v556, %v560
  %v569 = vmul.f32 %v544, %v565
  %v570 = vmul.f32 %v544, %v566
  %v571 = vadd.f32 %v541, %v569
  %v572 = vadd.f32 %v542, %v570
  %s573 = scalar_lea.vmem %s1, 112
  %v574 = vld [vmem:[%s573] sm:$0xff]
  %v575 = vlaneseq
  %v576 = vshrl.u32 %v575, 7
  %v577 = vsub.s32 2, %v576
  %v578 = vrot.slane %v505, %v577
  %v579 = vlaneseq
  %v580 = vshrl.u32 %v579, 7
  %v581 = vsub.s32 2, %v580
  %v582 = vrot.slane %v511, %v581
  %v583 = vlaneseq
  %v584 = vshrl.u32 %v583, 7
  %v585 = vsub.s32 2, %v584
  %v586 = vrot.slane %v506, %v585
  %v587 = vlaneseq
  %v588 = vshrl.u32 %v587, 7
  %v589 = vsub.s32 2, %v588
  %v590 = vrot.slane %v512, %v589
  %v595 = vcombine.low %v578, %v582
  %v596 = vcombine.low %v586, %v590
  %v599 = vmul.f32 %v574, %v595
  %v600 = vmul.f32 %v574, %v596
  %v601 = vadd.f32 %v571, %v599
  %v602 = vadd.f32 %v572, %v600
  %s603 = scalar_lea.vmem %s1, 120
  %v604 = vld [vmem:[%s603] sm:$0xff]
  %v605 = vlaneseq
  %v606 = vshrl.u32 %v605, 7
  %v607 = vsub.s32 3, %v606
  %v608 = vrot.slane %v505, %v607
  %v609 = vlaneseq
  %v610 = vshrl.u32 %v609, 7
  %v611 = vsub.s32 3, %v610
  %v612 = vrot.slane %v511, %v611
  %v613 = vlaneseq
  %v614 = vshrl.u32 %v613, 7
  %v615 = vsub.s32 3, %v614
  %v616 = vrot.slane %v506, %v615
  %v617 = vlaneseq
  %v618 = vshrl.u32 %v617, 7
  %v619 = vsub.s32 3, %v618
  %v620 = vrot.slane %v512, %v619
  %v625 = vcombine.low %v608, %v612
  %v626 = vcombine.low %v616, %v620
  %v629 = vmul.f32 %v604, %v625
  %v630 = vmul.f32 %v604, %v626
  %v631 = vadd.f32 %v601, %v629
  %v632 = vadd.f32 %v602, %v630
  %v635 = vsel %vm31, %v26, 0.0
  %v636 = vsel %vm31, %v30, 0.0
  %s637 = scalar_lea.vmem %s1, 128
  %v638 = vld [vmem:[%s637] sm:$0xff]
  %v639 = vlaneseq
  %v640 = vshrl.u32 %v639, 7
  %v641 = vsub.s32 0, %v640
  %v642 = vrot.slane %v635, %v641
  %v643 = vlaneseq
  %v644 = vshrl.u32 %v643, 7
  %v645 = vsub.s32 0, %v644
  %v646 = vrot.slane %v636, %v645
  %v649 = vcombine.low %v48, %v642
  %v650 = vcombine.low %v56, %v646
  %v653 = vmul.f32 %v638, %v649
  %v654 = vmul.f32 %v638, %v650
  %v655 = vadd.f32 %v631, %v653
  %v656 = vadd.f32 %v632, %v654
  %s657 = scalar_lea.vmem %s1, 136
  %v658 = vld [vmem:[%s657] sm:$0xff]
  %v659 = vlaneseq
  %v660 = vshrl.u32 %v659, 7
  %v661 = vsub.s32 1, %v660
  %v662 = vrot.slane %v635, %v661
  %v663 = vlaneseq
  %v664 = vshrl.u32 %v663, 7
  %v665 = vsub.s32 1, %v664
  %v666 = vrot.slane %v636, %v665
  %v669 = vcombine.low %v78, %v662
  %v670 = vcombine.low %v86, %v666
  %v673 = vmul.f32 %v658, %v669
  %v674 = vmul.f32 %v658, %v670
  %v675 = vadd.f32 %v655, %v673
  %v676 = vadd.f32 %v656, %v674
  %s677 = scalar_lea.vmem %s1, 144
  %v678 = vld [vmem:[%s677] sm:$0xff]
  %v679 = vlaneseq
  %v680 = vshrl.u32 %v679, 7
  %v681 = vsub.s32 2, %v680
  %v682 = vrot.slane %v635, %v681
  %v683 = vlaneseq
  %v684 = vshrl.u32 %v683, 7
  %v685 = vsub.s32 2, %v684
  %v686 = vrot.slane %v636, %v685
  %v689 = vcombine.low %v108, %v682
  %v690 = vcombine.low %v116, %v686
  %v693 = vmul.f32 %v678, %v689
  %v694 = vmul.f32 %v678, %v690
  %v695 = vadd.f32 %v675, %v693
  %v696 = vadd.f32 %v676, %v694
  %s697 = scalar_lea.vmem %s1, 152
  %v698 = vld [vmem:[%s697] sm:$0xff]
  %v699 = vlaneseq
  %v700 = vshrl.u32 %v699, 7
  %v701 = vsub.s32 3, %v700
  %v702 = vrot.slane %v635, %v701
  %v703 = vlaneseq
  %v704 = vshrl.u32 %v703, 7
  %v705 = vsub.s32 3, %v704
  %v706 = vrot.slane %v636, %v705
  %v709 = vcombine.low %v138, %v702
  %v710 = vcombine.low %v146, %v706
  %v713 = vmul.f32 %v698, %v709
  %v714 = vmul.f32 %v698, %v710
  %v715 = vadd.f32 %v695, %v713
  %v716 = vadd.f32 %v696, %v714
  %v717 = vld [vmem:[%s2] sm:$0xff]
  %v720 = vcombine.high %v715, %v715
  %v721 = vcombine.high %v716, %v716
  %722 = vrot.lane.b32.xlu0 %v715, 2
  %v723 = vpop.permute.xlu0 %722
  %724 = vrot.lane.b32.xlu0 %v720, 2
  %v725 = vpop.permute.xlu0 %724
  %726 = vrot.lane.b32.xlu0 %v716, 2
  %v727 = vpop.permute.xlu0 %726
  %728 = vrot.lane.b32.xlu0 %v721, 2
  %v729 = vpop.permute.xlu0 %728
  %vm730 = vcmask 15360
  %v731 = vsel %vm730, %v723, %v725
  %v732 = vsel %vm730, %v727, %v729
  %v735 = vsel %vm730, 0.0, %v723
  %v736 = vsel %vm730, 0.0, %v727
  %v739 = vcombine.low %v735, %v731
  %v740 = vcombine.low %v736, %v732
  %v743 = vmul.f32 %v717, %v739
  %v744 = vmul.f32 %v717, %v740
  %v745 = vadd.f32 %v743, 0.0
  %v746 = vadd.f32 %v744, 0.0
  %s747 = scalar_lea.vmem %s2, 8
  %v748 = vld [vmem:[%s747] sm:$0xff]
  %749 = vrot.lane.b32.xlu0 %v715, 1
  %v750 = vpop.permute.xlu0 %749
  %751 = vrot.lane.b32.xlu0 %v720, 1
  %v752 = vpop.permute.xlu0 %751
  %753 = vrot.lane.b32.xlu0 %v716, 1
  %v754 = vpop.permute.xlu0 %753
  %755 = vrot.lane.b32.xlu0 %v721, 1
  %v756 = vpop.permute.xlu0 %755
  %vm757 = vcmask 7168
  %v758 = vsel %vm757, %v750, %v752
  %v759 = vsel %vm757, %v754, %v756
  %v762 = vsel %vm757, 0.0, %v750
  %v763 = vsel %vm757, 0.0, %v754
  %v766 = vcombine.low %v762, %v758
  %v767 = vcombine.low %v763, %v759
  %v770 = vmul.f32 %v748, %v766
  %v771 = vmul.f32 %v748, %v767
  %v772 = vadd.f32 %v745, %v770
  %v773 = vadd.f32 %v746, %v771
  %s774 = scalar_lea.vmem %s2, 16
  %v775 = vld [vmem:[%s774] sm:$0xff]
  %v776 = vmul.f32 %v775, %v715
  %v777 = vmul.f32 %v775, %v716
  %v778 = vadd.f32 %v772, %v776
  %v779 = vadd.f32 %v773, %v777
  %s780 = scalar_lea.vmem %s2, 24
  %v781 = vld [vmem:[%s780] sm:$0xff]
  %782 = vrot.lane.b32.xlu0 %v715, 127
  %v783 = vpop.permute.xlu0 %782
  %784 = vrot.lane.b32.xlu0 %v720, 127
  %v785 = vpop.permute.xlu0 %784
  %786 = vrot.lane.b32.xlu0 %v716, 127
  %v787 = vpop.permute.xlu0 %786
  %788 = vrot.lane.b32.xlu0 %v721, 127
  %v789 = vpop.permute.xlu0 %788
  %vm790 = vcmask 1039360
  %v791 = vsel %vm790, %v783, %v785
  %v792 = vsel %vm790, %v787, %v789
  %v795 = vsel %vm790, %v785, 0.0
  %v796 = vsel %vm790, %v789, 0.0
  %v799 = vcombine.low %v791, %v795
  %v800 = vcombine.low %v792, %v796
  %v803 = vmul.f32 %v781, %v799
  %v804 = vmul.f32 %v781, %v800
  %v805 = vadd.f32 %v778, %v803
  %v806 = vadd.f32 %v779, %v804
  %s807 = scalar_lea.vmem %s2, 32
  %v808 = vld [vmem:[%s807] sm:$0xff]
  %809 = vrot.lane.b32.xlu0 %v715, 126
  %v810 = vpop.permute.xlu0 %809
  %811 = vrot.lane.b32.xlu0 %v720, 126
  %v812 = vpop.permute.xlu0 %811
  %813 = vrot.lane.b32.xlu0 %v716, 126
  %v814 = vpop.permute.xlu0 %813
  %815 = vrot.lane.b32.xlu0 %v721, 126
  %v816 = vpop.permute.xlu0 %815
  %vm817 = vcmask 1031168
  %v818 = vsel %vm817, %v810, %v812
  %v819 = vsel %vm817, %v814, %v816
  %v822 = vsel %vm817, %v812, 0.0
  %v823 = vsel %vm817, %v816, 0.0
  %v826 = vcombine.low %v818, %v822
  %v827 = vcombine.low %v819, %v823
  %v830 = vmul.f32 %v808, %v826
  %v831 = vmul.f32 %v808, %v827
  %v832 = vadd.f32 %v805, %v830
  %v833 = vadd.f32 %v806, %v831
  %v836 = vcombine.high %v832, %v832
  %v837 = vcombine.high %v833, %v833
  %vm840 = vcmask 1043456
  %v841 = vsel %vm840, %v832, 0.0
  %v842 = vsel %vm840, %v836, 0.0
  %v843 = vadd.f32 %v841, %v842
  %v844 = vsel %vm840, %v833, 0.0
  %v845 = vadd.f32 %v843, %v844
  %v846 = vsel %vm840, %v837, 0.0
  %v847 = vadd.f32 %v845, %v846
  %848 = vadd.xlane.f32.xlu0 %v847
  %v849 = vpop.xlane.xlu0 %848
  %v850 = vmul.f32 %v832, %v832
  %v851 = vmul.f32 %v833, %v833
  %v854 = vcombine.high %v850, %v850
  %v855 = vcombine.high %v851, %v851
  %v858 = vsel %vm840, %v850, 0.0
  %v859 = vsel %vm840, %v854, 0.0
  %v860 = vadd.f32 %v858, %v859
  %v861 = vsel %vm840, %v851, 0.0
  %v862 = vadd.f32 %v860, %v861
  %v863 = vsel %vm840, %v855, 0.0
  %v864 = vadd.f32 %v862, %v863
  %865 = vadd.xlane.f32.xlu0 %v864
  %v866 = vpop.xlane.xlu0 %865
  %v867 = vmul.f32 %v849, 0.001953125
  %v868 = vmul.f32 %v866, 0.001953125
  %v869 = vmul.f32 %v867, %v867
  %v870 = vsub.f32 %v868, %v869
  %v871 = vmax.f32 %v870, 0.0
  %v872 = vld [vmem:[%s3] sm:$0xf]
  %s873 = scalar_lea.vmem %s3, 8
  %v874 = vld [vmem:[%s873] sm:$0xf]
  %s875 = scalar_lea.vmem %s3, 12
  %v876 = vld [vmem:[%s875] sm:$0xf]
  %v877 = vmul.f32 %v872, %v874
  %v878 = vmul.f32 %v872, %v872
  %v879 = vmul.f32 %v878, %v871
  %v880 = vadd.f32 %v879, 1e-05
  %v881 = vrsqrt.pop %v880
  %v882 = vmul.f32 %v877, %v881
  %v883 = vmul.f32 %v882, %v867
  %v884 = vsub.f32 %v876, %v883
  %886 = vset.pattern.permute.xlu0 0
  %887 = vperm.xlu0 %886, %v882
  %v888 = vpop.permute.xlu0 %887
  %v890 = vunpack.c.l.s4 839922192
  %v891 = vunpack.c.0.s8 %v890
  %v892 = vlaneseq
  %v893 = vshrl.u32 %v892, 7
  %v894 = vsub.s32 %v891, %v893
  %v895 = vrot.slane %v888, %v894
  %v897 = vmul.f32 %v832, %v895
  %v898 = vmul.f32 %v833, %v895
  %900 = vset.pattern.permute.xlu0 0
  %901 = vperm.xlu0 %900, %v884
  %v902 = vpop.permute.xlu0 %901
  %v904 = vunpack.c.l.s4 839922192
  %v905 = vunpack.c.0.s8 %v904
  %v906 = vlaneseq
  %v907 = vshrl.u32 %v906, 7
  %v908 = vsub.s32 %v905, %v907
  %v909 = vrot.slane %v902, %v908
  %v911 = vadd.f32 %v897, %v909
  %v912 = vadd.f32 %v898, %v909
  %v913 = vmul.f32 %v911, 0.01
  %v914 = vmul.f32 %v912, 0.01
  %v915 = vmax.f32 %v911, %v913
  %v916 = vmax.f32 %v912, %v914
  %v919 = vcombine.high %v915, %v915
  %v920 = vcombine.high %v916, %v916
  %921 = vrot.lane.b32.xlu0 %v915, 64
  %v922 = vpop.permute.xlu0 %921
  %923 = vrot.lane.b32.xlu0 %v919, 64
  %v924 = vpop.permute.xlu0 %923
  %925 = vrot.lane.b32.xlu0 %v916, 64
  %v926 = vpop.permute.xlu0 %925
  %927 = vrot.lane.b32.xlu0 %v920, 64
  %v928 = vpop.permute.xlu0 %927
  %v929 = vsel %vm31, %v922, %v924
  %v930 = vsel %vm31, %v926, %v928
  %v935 = vsel %vm31, 0.0, %v922
  %v936 = vsel %vm31, 0.0, %v926
  %s937 = scalar_lea.vmem %s1, 160
  %v938 = vld [vmem:[%s937] sm:$0xff]
  %v939 = vlaneseq
  %v940 = vshrl.u32 %v939, 7
  %v941 = vsub.s32 0, %v940
  %v942 = vrot.slane %v935, %v941
  %v943 = vlaneseq
  %v944 = vshrl.u32 %v943, 7
  %v945 = vsub.s32 0, %v944
  %v946 = vrot.slane %v929, %v945
  %v947 = vlaneseq
  %v948 = vshrl.u32 %v947, 7
  %v949 = vsub.s32 0, %v948
  %v950 = vrot.slane %v936, %v949
  %v951 = vlaneseq
  %v952 = vshrl.u32 %v951, 7
  %v953 = vsub.s32 0, %v952
  %v954 = vrot.slane %v930, %v953
  %v959 = vcombine.low %v942, %v946
  %v960 = vcombine.low %v950, %v954
  %v963 = vmul.f32 %v938, %v959
  %v964 = vmul.f32 %v938, %v960
  %v965 = vadd.f32 %v963, 0.0
  %v966 = vadd.f32 %v964, 0.0
  %s967 = scalar_lea.vmem %s1, 168
  %v968 = vld [vmem:[%s967] sm:$0xff]
  %v969 = vlaneseq
  %v970 = vshrl.u32 %v969, 7
  %v971 = vsub.s32 1, %v970
  %v972 = vrot.slane %v935, %v971
  %v973 = vlaneseq
  %v974 = vshrl.u32 %v973, 7
  %v975 = vsub.s32 1, %v974
  %v976 = vrot.slane %v929, %v975
  %v977 = vlaneseq
  %v978 = vshrl.u32 %v977, 7
  %v979 = vsub.s32 1, %v978
  %v980 = vrot.slane %v936, %v979
  %v981 = vlaneseq
  %v982 = vshrl.u32 %v981, 7
  %v983 = vsub.s32 1, %v982
  %v984 = vrot.slane %v930, %v983
  %v989 = vcombine.low %v972, %v976
  %v990 = vcombine.low %v980, %v984
  %v993 = vmul.f32 %v968, %v989
  %v994 = vmul.f32 %v968, %v990
  %v995 = vadd.f32 %v965, %v993
  %v996 = vadd.f32 %v966, %v994
  %s997 = scalar_lea.vmem %s1, 176
  %v998 = vld [vmem:[%s997] sm:$0xff]
  %v999 = vlaneseq
  %v1000 = vshrl.u32 %v999, 7
  %v1001 = vsub.s32 2, %v1000
  %v1002 = vrot.slane %v935, %v1001
  %v1003 = vlaneseq
  %v1004 = vshrl.u32 %v1003, 7
  %v1005 = vsub.s32 2, %v1004
  %v1006 = vrot.slane %v929, %v1005
  %v1007 = vlaneseq
  %v1008 = vshrl.u32 %v1007, 7
  %v1009 = vsub.s32 2, %v1008
  %v1010 = vrot.slane %v936, %v1009
  %v1011 = vlaneseq
  %v1012 = vshrl.u32 %v1011, 7
  %v1013 = vsub.s32 2, %v1012
  %v1014 = vrot.slane %v930, %v1013
  %v1019 = vcombine.low %v1002, %v1006
  %v1020 = vcombine.low %v1010, %v1014
  %v1023 = vmul.f32 %v998, %v1019
  %v1024 = vmul.f32 %v998, %v1020
  %v1025 = vadd.f32 %v995, %v1023
  %v1026 = vadd.f32 %v996, %v1024
  %s1027 = scalar_lea.vmem %s1, 184
  %v1028 = vld [vmem:[%s1027] sm:$0xff]
  %v1029 = vlaneseq
  %v1030 = vshrl.u32 %v1029, 7
  %v1031 = vsub.s32 3, %v1030
  %v1032 = vrot.slane %v935, %v1031
  %v1033 = vlaneseq
  %v1034 = vshrl.u32 %v1033, 7
  %v1035 = vsub.s32 3, %v1034
  %v1036 = vrot.slane %v929, %v1035
  %v1037 = vlaneseq
  %v1038 = vshrl.u32 %v1037, 7
  %v1039 = vsub.s32 3, %v1038
  %v1040 = vrot.slane %v936, %v1039
  %v1041 = vlaneseq
  %v1042 = vshrl.u32 %v1041, 7
  %v1043 = vsub.s32 3, %v1042
  %v1044 = vrot.slane %v930, %v1043
  %v1049 = vcombine.low %v1032, %v1036
  %v1050 = vcombine.low %v1040, %v1044
  %v1053 = vmul.f32 %v1028, %v1049
  %v1054 = vmul.f32 %v1028, %v1050
  %v1055 = vadd.f32 %v1025, %v1053
  %v1056 = vadd.f32 %v1026, %v1054
  %1057 = vrot.lane.b32.xlu0 %v915, 32
  %v1058 = vpop.permute.xlu0 %1057
  %1059 = vrot.lane.b32.xlu0 %v919, 32
  %v1060 = vpop.permute.xlu0 %1059
  %1061 = vrot.lane.b32.xlu0 %v916, 32
  %v1062 = vpop.permute.xlu0 %1061
  %1063 = vrot.lane.b32.xlu0 %v920, 32
  %v1064 = vpop.permute.xlu0 %1063
  %v1065 = vsel %vm167, %v1058, %v1060
  %v1066 = vsel %vm167, %v1062, %v1064
  %v1071 = vsel %vm167, 0.0, %v1058
  %v1072 = vsel %vm167, 0.0, %v1062
  %s1073 = scalar_lea.vmem %s1, 192
  %v1074 = vld [vmem:[%s1073] sm:$0xff]
  %v1075 = vlaneseq
  %v1076 = vshrl.u32 %v1075, 7
  %v1077 = vsub.s32 0, %v1076
  %v1078 = vrot.slane %v1071, %v1077
  %v1079 = vlaneseq
  %v1080 = vshrl.u32 %v1079, 7
  %v1081 = vsub.s32 0, %v1080
  %v1082 = vrot.slane %v1065, %v1081
  %v1083 = vlaneseq
  %v1084 = vshrl.u32 %v1083, 7
  %v1085 = vsub.s32 0, %v1084
  %v1086 = vrot.slane %v1072, %v1085
  %v1087 = vlaneseq
  %v1088 = vshrl.u32 %v1087, 7
  %v1089 = vsub.s32 0, %v1088
  %v1090 = vrot.slane %v1066, %v1089
  %v1095 = vcombine.low %v1078, %v1082
  %v1096 = vcombine.low %v1086, %v1090
  %v1099 = vmul.f32 %v1074, %v1095
  %v1100 = vmul.f32 %v1074, %v1096
  %v1101 = vadd.f32 %v1055, %v1099
  %v1102 = vadd.f32 %v1056, %v1100
  %s1103 = scalar_lea.vmem %s1, 200
  %v1104 = vld [vmem:[%s1103] sm:$0xff]
  %v1105 = vlaneseq
  %v1106 = vshrl.u32 %v1105, 7
  %v1107 = vsub.s32 1, %v1106
  %v1108 = vrot.slane %v1071, %v1107
  %v1109 = vlaneseq
  %v1110 = vshrl.u32 %v1109, 7
  %v1111 = vsub.s32 1, %v1110
  %v1112 = vrot.slane %v1065, %v1111
  %v1113 = vlaneseq
  %v1114 = vshrl.u32 %v1113, 7
  %v1115 = vsub.s32 1, %v1114
  %v1116 = vrot.slane %v1072, %v1115
  %v1117 = vlaneseq
  %v1118 = vshrl.u32 %v1117, 7
  %v1119 = vsub.s32 1, %v1118
  %v1120 = vrot.slane %v1066, %v1119
  %v1125 = vcombine.low %v1108, %v1112
  %v1126 = vcombine.low %v1116, %v1120
  %v1129 = vmul.f32 %v1104, %v1125
  %v1130 = vmul.f32 %v1104, %v1126
  %v1131 = vadd.f32 %v1101, %v1129
  %v1132 = vadd.f32 %v1102, %v1130
  %s1133 = scalar_lea.vmem %s1, 208
  %v1134 = vld [vmem:[%s1133] sm:$0xff]
  %v1135 = vlaneseq
  %v1136 = vshrl.u32 %v1135, 7
  %v1137 = vsub.s32 2, %v1136
  %v1138 = vrot.slane %v1071, %v1137
  %v1139 = vlaneseq
  %v1140 = vshrl.u32 %v1139, 7
  %v1141 = vsub.s32 2, %v1140
  %v1142 = vrot.slane %v1065, %v1141
  %v1143 = vlaneseq
  %v1144 = vshrl.u32 %v1143, 7
  %v1145 = vsub.s32 2, %v1144
  %v1146 = vrot.slane %v1072, %v1145
  %v1147 = vlaneseq
  %v1148 = vshrl.u32 %v1147, 7
  %v1149 = vsub.s32 2, %v1148
  %v1150 = vrot.slane %v1066, %v1149
  %v1155 = vcombine.low %v1138, %v1142
  %v1156 = vcombine.low %v1146, %v1150
  %v1159 = vmul.f32 %v1134, %v1155
  %v1160 = vmul.f32 %v1134, %v1156
  %v1161 = vadd.f32 %v1131, %v1159
  %v1162 = vadd.f32 %v1132, %v1160
  %s1163 = scalar_lea.vmem %s1, 216
  %v1164 = vld [vmem:[%s1163] sm:$0xff]
  %v1165 = vlaneseq
  %v1166 = vshrl.u32 %v1165, 7
  %v1167 = vsub.s32 3, %v1166
  %v1168 = vrot.slane %v1071, %v1167
  %v1169 = vlaneseq
  %v1170 = vshrl.u32 %v1169, 7
  %v1171 = vsub.s32 3, %v1170
  %v1172 = vrot.slane %v1065, %v1171
  %v1173 = vlaneseq
  %v1174 = vshrl.u32 %v1173, 7
  %v1175 = vsub.s32 3, %v1174
  %v1176 = vrot.slane %v1072, %v1175
  %v1177 = vlaneseq
  %v1178 = vshrl.u32 %v1177, 7
  %v1179 = vsub.s32 3, %v1178
  %v1180 = vrot.slane %v1066, %v1179
  %v1185 = vcombine.low %v1168, %v1172
  %v1186 = vcombine.low %v1176, %v1180
  %v1189 = vmul.f32 %v1164, %v1185
  %v1190 = vmul.f32 %v1164, %v1186
  %v1191 = vadd.f32 %v1161, %v1189
  %v1192 = vadd.f32 %v1162, %v1190
  %s1193 = scalar_lea.vmem %s1, 224
  %v1194 = vld [vmem:[%s1193] sm:$0xff]
  %v1195 = vlaneseq
  %v1196 = vshrl.u32 %v1195, 7
  %v1197 = vsub.s32 0, %v1196
  %v1198 = vrot.slane %v915, %v1197
  %v1199 = vlaneseq
  %v1200 = vshrl.u32 %v1199, 7
  %v1201 = vsub.s32 4, %v1200
  %v1202 = vrot.slane %v915, %v1201
  %v1203 = vlaneseq
  %v1204 = vshrl.u32 %v1203, 7
  %v1205 = vsub.s32 0, %v1204
  %v1206 = vrot.slane %v916, %v1205
  %v1207 = vlaneseq
  %v1208 = vshrl.u32 %v1207, 7
  %v1209 = vsub.s32 4, %v1208
  %v1210 = vrot.slane %v916, %v1209
  %v1215 = vlaneseq
  %v1216 = vshrl.u32 %v1215, 7
  %v1217 = vsub.s32 0, %v1216
  %v1218 = vrot.slane %v1198, %v1217
  %v1219 = vlaneseq
  %v1220 = vshrl.u32 %v1219, 7
  %v1221 = vsub.s32 0, %v1220
  %v1222 = vrot.slane %v1202, %v1221
  %v1223 = vlaneseq
  %v1224 = vshrl.u32 %v1223, 7
  %v1225 = vsub.s32 0, %v1224
  %v1226 = vrot.slane %v1206, %v1225
  %v1227 = vlaneseq
  %v1228 = vshrl.u32 %v1227, 7
  %v1229 = vsub.s32 0, %v1228
  %v1230 = vrot.slane %v1210, %v1229
  %v1235 = vcombine.low %v1218, %v1222
  %v1236 = vcombine.low %v1226, %v1230
  %v1239 = vmul.f32 %v1194, %v1235
  %v1240 = vmul.f32 %v1194, %v1236
  %v1241 = vadd.f32 %v1191, %v1239
  %v1242 = vadd.f32 %v1192, %v1240
  %s1243 = scalar_lea.vmem %s1, 232
  %v1244 = vld [vmem:[%s1243] sm:$0xff]
  %v1245 = vlaneseq
  %v1246 = vshrl.u32 %v1245, 7
  %v1247 = vsub.s32 1, %v1246
  %v1248 = vrot.slane %v915, %v1247
  %v1249 = vlaneseq
  %v1250 = vshrl.u32 %v1249, 7
  %v1251 = vsub.s32 5, %v1250
  %v1252 = vrot.slane %v915, %v1251
  %v1253 = vlaneseq
  %v1254 = vshrl.u32 %v1253, 7
  %v1255 = vsub.s32 1, %v1254
  %v1256 = vrot.slane %v916, %v1255
  %v1257 = vlaneseq
  %v1258 = vshrl.u32 %v1257, 7
  %v1259 = vsub.s32 5, %v1258
  %v1260 = vrot.slane %v916, %v1259
  %v1265 = vlaneseq
  %v1266 = vshrl.u32 %v1265, 7
  %v1267 = vsub.s32 1, %v1266
  %v1268 = vrot.slane %v1248, %v1267
  %v1269 = vlaneseq
  %v1270 = vshrl.u32 %v1269, 7
  %v1271 = vsub.s32 1, %v1270
  %v1272 = vrot.slane %v1252, %v1271
  %v1273 = vlaneseq
  %v1274 = vshrl.u32 %v1273, 7
  %v1275 = vsub.s32 1, %v1274
  %v1276 = vrot.slane %v1256, %v1275
  %v1277 = vlaneseq
  %v1278 = vshrl.u32 %v1277, 7
  %v1279 = vsub.s32 1, %v1278
  %v1280 = vrot.slane %v1260, %v1279
  %v1285 = vcombine.low %v1268, %v1272
  %v1286 = vcombine.low %v1276, %v1280
  %v1289 = vmul.f32 %v1244, %v1285
  %v1290 = vmul.f32 %v1244, %v1286
  %v1291 = vadd.f32 %v1241, %v1289
  %v1292 = vadd.f32 %v1242, %v1290
  %s1293 = scalar_lea.vmem %s1, 240
  %v1294 = vld [vmem:[%s1293] sm:$0xff]
  %v1295 = vlaneseq
  %v1296 = vshrl.u32 %v1295, 7
  %v1297 = vsub.s32 2, %v1296
  %v1298 = vrot.slane %v915, %v1297
  %v1299 = vlaneseq
  %v1300 = vshrl.u32 %v1299, 7
  %v1301 = vsub.s32 6, %v1300
  %v1302 = vrot.slane %v915, %v1301
  %v1303 = vlaneseq
  %v1304 = vshrl.u32 %v1303, 7
  %v1305 = vsub.s32 2, %v1304
  %v1306 = vrot.slane %v916, %v1305
  %v1307 = vlaneseq
  %v1308 = vshrl.u32 %v1307, 7
  %v1309 = vsub.s32 6, %v1308
  %v1310 = vrot.slane %v916, %v1309
  %v1315 = vlaneseq
  %v1316 = vshrl.u32 %v1315, 7
  %v1317 = vsub.s32 2, %v1316
  %v1318 = vrot.slane %v1298, %v1317
  %v1319 = vlaneseq
  %v1320 = vshrl.u32 %v1319, 7
  %v1321 = vsub.s32 2, %v1320
  %v1322 = vrot.slane %v1302, %v1321
  %v1323 = vlaneseq
  %v1324 = vshrl.u32 %v1323, 7
  %v1325 = vsub.s32 2, %v1324
  %v1326 = vrot.slane %v1306, %v1325
  %v1327 = vlaneseq
  %v1328 = vshrl.u32 %v1327, 7
  %v1329 = vsub.s32 2, %v1328
  %v1330 = vrot.slane %v1310, %v1329
  %v1335 = vcombine.low %v1318, %v1322
  %v1336 = vcombine.low %v1326, %v1330
  %v1339 = vmul.f32 %v1294, %v1335
  %v1340 = vmul.f32 %v1294, %v1336
  %v1341 = vadd.f32 %v1291, %v1339
  %v1342 = vadd.f32 %v1292, %v1340
  %s1343 = scalar_lea.vmem %s1, 248
  %v1344 = vld [vmem:[%s1343] sm:$0xff]
  %v1345 = vlaneseq
  %v1346 = vshrl.u32 %v1345, 7
  %v1347 = vsub.s32 3, %v1346
  %v1348 = vrot.slane %v915, %v1347
  %v1349 = vlaneseq
  %v1350 = vshrl.u32 %v1349, 7
  %v1351 = vsub.s32 7, %v1350
  %v1352 = vrot.slane %v915, %v1351
  %v1353 = vlaneseq
  %v1354 = vshrl.u32 %v1353, 7
  %v1355 = vsub.s32 3, %v1354
  %v1356 = vrot.slane %v916, %v1355
  %v1357 = vlaneseq
  %v1358 = vshrl.u32 %v1357, 7
  %v1359 = vsub.s32 7, %v1358
  %v1360 = vrot.slane %v916, %v1359
  %v1365 = vlaneseq
  %v1366 = vshrl.u32 %v1365, 7
  %v1367 = vsub.s32 3, %v1366
  %v1368 = vrot.slane %v1348, %v1367
  %v1369 = vlaneseq
  %v1370 = vshrl.u32 %v1369, 7
  %v1371 = vsub.s32 3, %v1370
  %v1372 = vrot.slane %v1352, %v1371
  %v1373 = vlaneseq
  %v1374 = vshrl.u32 %v1373, 7
  %v1375 = vsub.s32 3, %v1374
  %v1376 = vrot.slane %v1356, %v1375
  %v1377 = vlaneseq
  %v1378 = vshrl.u32 %v1377, 7
  %v1379 = vsub.s32 3, %v1378
  %v1380 = vrot.slane %v1360, %v1379
  %v1385 = vcombine.low %v1368, %v1372
  %v1386 = vcombine.low %v1376, %v1380
  %v1389 = vmul.f32 %v1344, %v1385
  %v1390 = vmul.f32 %v1344, %v1386
  %v1391 = vadd.f32 %v1341, %v1389
  %v1392 = vadd.f32 %v1342, %v1390
  %1393 = vrot.lane.b32.xlu0 %v915, 96
  %v1394 = vpop.permute.xlu0 %1393
  %1395 = vrot.lane.b32.xlu0 %v919, 96
  %v1396 = vpop.permute.xlu0 %1395
  %1397 = vrot.lane.b32.xlu0 %v916, 96
  %v1398 = vpop.permute.xlu0 %1397
  %1399 = vrot.lane.b32.xlu0 %v920, 96
  %v1400 = vpop.permute.xlu0 %1399
  %v1401 = vsel %vm504, %v1394, %v1396
  %v1402 = vsel %vm504, %v1398, %v1400
  %v1407 = vsel %vm504, %v1396, 0.0
  %v1408 = vsel %vm504, %v1400, 0.0
  %s1409 = scalar_lea.vmem %s1, 256
  %v1410 = vld [vmem:[%s1409] sm:$0xff]
  %v1411 = vlaneseq
  %v1412 = vshrl.u32 %v1411, 7
  %v1413 = vsub.s32 0, %v1412
  %v1414 = vrot.slane %v1401, %v1413
  %v1415 = vlaneseq
  %v1416 = vshrl.u32 %v1415, 7
  %v1417 = vsub.s32 0, %v1416
  %v1418 = vrot.slane %v1407, %v1417
  %v1419 = vlaneseq
  %v1420 = vshrl.u32 %v1419, 7
  %v1421 = vsub.s32 0, %v1420
  %v1422 = vrot.slane %v1402, %v1421
  %v1423 = vlaneseq
  %v1424 = vshrl.u32 %v1423, 7
  %v1425 = vsub.s32 0, %v1424
  %v1426 = vrot.slane %v1408, %v1425
  %v1431 = vcombine.low %v1414, %v1418
  %v1432 = vcombine.low %v1422, %v1426
  %v1435 = vmul.f32 %v1410, %v1431
  %v1436 = vmul.f32 %v1410, %v1432
  %v1437 = vadd.f32 %v1391, %v1435
  %v1438 = vadd.f32 %v1392, %v1436
  %s1439 = scalar_lea.vmem %s1, 264
  %v1440 = vld [vmem:[%s1439] sm:$0xff]
  %v1441 = vlaneseq
  %v1442 = vshrl.u32 %v1441, 7
  %v1443 = vsub.s32 1, %v1442
  %v1444 = vrot.slane %v1401, %v1443
  %v1445 = vlaneseq
  %v1446 = vshrl.u32 %v1445, 7
  %v1447 = vsub.s32 1, %v1446
  %v1448 = vrot.slane %v1407, %v1447
  %v1449 = vlaneseq
  %v1450 = vshrl.u32 %v1449, 7
  %v1451 = vsub.s32 1, %v1450
  %v1452 = vrot.slane %v1402, %v1451
  %v1453 = vlaneseq
  %v1454 = vshrl.u32 %v1453, 7
  %v1455 = vsub.s32 1, %v1454
  %v1456 = vrot.slane %v1408, %v1455
  %v1461 = vcombine.low %v1444, %v1448
  %v1462 = vcombine.low %v1452, %v1456
  %v1465 = vmul.f32 %v1440, %v1461
  %v1466 = vmul.f32 %v1440, %v1462
  %v1467 = vadd.f32 %v1437, %v1465
  %v1468 = vadd.f32 %v1438, %v1466
  %s1469 = scalar_lea.vmem %s1, 272
  %v1470 = vld [vmem:[%s1469] sm:$0xff]
  %v1471 = vlaneseq
  %v1472 = vshrl.u32 %v1471, 7
  %v1473 = vsub.s32 2, %v1472
  %v1474 = vrot.slane %v1401, %v1473
  %v1475 = vlaneseq
  %v1476 = vshrl.u32 %v1475, 7
  %v1477 = vsub.s32 2, %v1476
  %v1478 = vrot.slane %v1407, %v1477
  %v1479 = vlaneseq
  %v1480 = vshrl.u32 %v1479, 7
  %v1481 = vsub.s32 2, %v1480
  %v1482 = vrot.slane %v1402, %v1481
  %v1483 = vlaneseq
  %v1484 = vshrl.u32 %v1483, 7
  %v1485 = vsub.s32 2, %v1484
  %v1486 = vrot.slane %v1408, %v1485
  %v1491 = vcombine.low %v1474, %v1478
  %v1492 = vcombine.low %v1482, %v1486
  %v1495 = vmul.f32 %v1470, %v1491
  %v1496 = vmul.f32 %v1470, %v1492
  %v1497 = vadd.f32 %v1467, %v1495
  %v1498 = vadd.f32 %v1468, %v1496
  %s1499 = scalar_lea.vmem %s1, 280
  %v1500 = vld [vmem:[%s1499] sm:$0xff]
  %v1501 = vlaneseq
  %v1502 = vshrl.u32 %v1501, 7
  %v1503 = vsub.s32 3, %v1502
  %v1504 = vrot.slane %v1401, %v1503
  %v1505 = vlaneseq
  %v1506 = vshrl.u32 %v1505, 7
  %v1507 = vsub.s32 3, %v1506
  %v1508 = vrot.slane %v1407, %v1507
  %v1509 = vlaneseq
  %v1510 = vshrl.u32 %v1509, 7
  %v1511 = vsub.s32 3, %v1510
  %v1512 = vrot.slane %v1402, %v1511
  %v1513 = vlaneseq
  %v1514 = vshrl.u32 %v1513, 7
  %v1515 = vsub.s32 3, %v1514
  %v1516 = vrot.slane %v1408, %v1515
  %v1521 = vcombine.low %v1504, %v1508
  %v1522 = vcombine.low %v1512, %v1516
  %v1525 = vmul.f32 %v1500, %v1521
  %v1526 = vmul.f32 %v1500, %v1522
  %v1527 = vadd.f32 %v1497, %v1525
  %v1528 = vadd.f32 %v1498, %v1526
  %v1531 = vsel %vm31, %v924, 0.0
  %v1532 = vsel %vm31, %v928, 0.0
  %s1533 = scalar_lea.vmem %s1, 288
  %v1534 = vld [vmem:[%s1533] sm:$0xff]
  %v1535 = vlaneseq
  %v1536 = vshrl.u32 %v1535, 7
  %v1537 = vsub.s32 0, %v1536
  %v1538 = vrot.slane %v1531, %v1537
  %v1539 = vlaneseq
  %v1540 = vshrl.u32 %v1539, 7
  %v1541 = vsub.s32 0, %v1540
  %v1542 = vrot.slane %v1532, %v1541
  %v1545 = vcombine.low %v946, %v1538
  %v1546 = vcombine.low %v954, %v1542
  %v1549 = vmul.f32 %v1534, %v1545
  %v1550 = vmul.f32 %v1534, %v1546
  %v1551 = vadd.f32 %v1527, %v1549
  %v1552 = vadd.f32 %v1528, %v1550
  %s1553 = scalar_lea.vmem %s1, 296
  %v1554 = vld [vmem:[%s1553] sm:$0xff]
  %v1555 = vlaneseq
  %v1556 = vshrl.u32 %v1555, 7
  %v1557 = vsub.s32 1, %v1556
  %v1558 = vrot.slane %v1531, %v1557
  %v1559 = vlaneseq
  %v1560 = vshrl.u32 %v1559, 7
  %v1561 = vsub.s32 1, %v1560
  %v1562 = vrot.slane %v1532, %v1561
  %v1565 = vcombine.low %v976, %v1558
  %v1566 = vcombine.low %v984, %v1562
  %v1569 = vmul.f32 %v1554, %v1565
  %v1570 = vmul.f32 %v1554, %v1566
  %v1571 = vadd.f32 %v1551, %v1569
  %v1572 = vadd.f32 %v1552, %v1570
  %s1573 = scalar_lea.vmem %s1, 304
  %v1574 = vld [vmem:[%s1573] sm:$0xff]
  %v1575 = vlaneseq
  %v1576 = vshrl.u32 %v1575, 7
  %v1577 = vsub.s32 2, %v1576
  %v1578 = vrot.slane %v1531, %v1577
  %v1579 = vlaneseq
  %v1580 = vshrl.u32 %v1579, 7
  %v1581 = vsub.s32 2, %v1580
  %v1582 = vrot.slane %v1532, %v1581
  %v1585 = vcombine.low %v1006, %v1578
  %v1586 = vcombine.low %v1014, %v1582
  %v1589 = vmul.f32 %v1574, %v1585
  %v1590 = vmul.f32 %v1574, %v1586
  %v1591 = vadd.f32 %v1571, %v1589
  %v1592 = vadd.f32 %v1572, %v1590
  %s1593 = scalar_lea.vmem %s1, 312
  %v1594 = vld [vmem:[%s1593] sm:$0xff]
  %v1595 = vlaneseq
  %v1596 = vshrl.u32 %v1595, 7
  %v1597 = vsub.s32 3, %v1596
  %v1598 = vrot.slane %v1531, %v1597
  %v1599 = vlaneseq
  %v1600 = vshrl.u32 %v1599, 7
  %v1601 = vsub.s32 3, %v1600
  %v1602 = vrot.slane %v1532, %v1601
  %v1605 = vcombine.low %v1036, %v1598
  %v1606 = vcombine.low %v1044, %v1602
  %v1609 = vmul.f32 %v1594, %v1605
  %v1610 = vmul.f32 %v1594, %v1606
  %v1611 = vadd.f32 %v1591, %v1609
  %v1612 = vadd.f32 %v1592, %v1610
  %s1613 = scalar_lea.vmem %s2, 40
  %v1614 = vld [vmem:[%s1613] sm:$0xff]
  %v1617 = vcombine.high %v1611, %v1611
  %v1618 = vcombine.high %v1612, %v1612
  %1619 = vrot.lane.b32.xlu0 %v1611, 2
  %v1620 = vpop.permute.xlu0 %1619
  %1621 = vrot.lane.b32.xlu0 %v1617, 2
  %v1622 = vpop.permute.xlu0 %1621
  %1623 = vrot.lane.b32.xlu0 %v1612, 2
  %v1624 = vpop.permute.xlu0 %1623
  %1625 = vrot.lane.b32.xlu0 %v1618, 2
  %v1626 = vpop.permute.xlu0 %1625
  %v1627 = vsel %vm730, %v1620, %v1622
  %v1628 = vsel %vm730, %v1624, %v1626
  %v1631 = vsel %vm730, 0.0, %v1620
  %v1632 = vsel %vm730, 0.0, %v1624
  %v1635 = vcombine.low %v1631, %v1627
  %v1636 = vcombine.low %v1632, %v1628
  %v1639 = vmul.f32 %v1614, %v1635
  %v1640 = vmul.f32 %v1614, %v1636
  %v1641 = vadd.f32 %v1639, 0.0
  %v1642 = vadd.f32 %v1640, 0.0
  %s1643 = scalar_lea.vmem %s2, 48
  %v1644 = vld [vmem:[%s1643] sm:$0xff]
  %1645 = vrot.lane.b32.xlu0 %v1611, 1
  %v1646 = vpop.permute.xlu0 %1645
  %1647 = vrot.lane.b32.xlu0 %v1617, 1
  %v1648 = vpop.permute.xlu0 %1647
  %1649 = vrot.lane.b32.xlu0 %v1612, 1
  %v1650 = vpop.permute.xlu0 %1649
  %1651 = vrot.lane.b32.xlu0 %v1618, 1
  %v1652 = vpop.permute.xlu0 %1651
  %v1653 = vsel %vm757, %v1646, %v1648
  %v1654 = vsel %vm757, %v1650, %v1652
  %v1657 = vsel %vm757, 0.0, %v1646
  %v1658 = vsel %vm757, 0.0, %v1650
  %v1661 = vcombine.low %v1657, %v1653
  %v1662 = vcombine.low %v1658, %v1654
  %v1665 = vmul.f32 %v1644, %v1661
  %v1666 = vmul.f32 %v1644, %v1662
  %v1667 = vadd.f32 %v1641, %v1665
  %v1668 = vadd.f32 %v1642, %v1666
  %s1669 = scalar_lea.vmem %s2, 56
  %v1670 = vld [vmem:[%s1669] sm:$0xff]
  %v1671 = vmul.f32 %v1670, %v1611
  %v1672 = vmul.f32 %v1670, %v1612
  %v1673 = vadd.f32 %v1667, %v1671
  %v1674 = vadd.f32 %v1668, %v1672
  %s1675 = scalar_lea.vmem %s2, 64
  %v1676 = vld [vmem:[%s1675] sm:$0xff]
  %1677 = vrot.lane.b32.xlu0 %v1611, 127
  %v1678 = vpop.permute.xlu0 %1677
  %1679 = vrot.lane.b32.xlu0 %v1617, 127
  %v1680 = vpop.permute.xlu0 %1679
  %1681 = vrot.lane.b32.xlu0 %v1612, 127
  %v1682 = vpop.permute.xlu0 %1681
  %1683 = vrot.lane.b32.xlu0 %v1618, 127
  %v1684 = vpop.permute.xlu0 %1683
  %v1685 = vsel %vm790, %v1678, %v1680
  %v1686 = vsel %vm790, %v1682, %v1684
  %v1689 = vsel %vm790, %v1680, 0.0
  %v1690 = vsel %vm790, %v1684, 0.0
  %v1693 = vcombine.low %v1685, %v1689
  %v1694 = vcombine.low %v1686, %v1690
  %v1697 = vmul.f32 %v1676, %v1693
  %v1698 = vmul.f32 %v1676, %v1694
  %v1699 = vadd.f32 %v1673, %v1697
  %v1700 = vadd.f32 %v1674, %v1698
  %s1701 = scalar_lea.vmem %s2, 72
  %v1702 = vld [vmem:[%s1701] sm:$0xff]
  %1703 = vrot.lane.b32.xlu0 %v1611, 126
  %v1704 = vpop.permute.xlu0 %1703
  %1705 = vrot.lane.b32.xlu0 %v1617, 126
  %v1706 = vpop.permute.xlu0 %1705
  %1707 = vrot.lane.b32.xlu0 %v1612, 126
  %v1708 = vpop.permute.xlu0 %1707
  %1709 = vrot.lane.b32.xlu0 %v1618, 126
  %v1710 = vpop.permute.xlu0 %1709
  %v1711 = vsel %vm817, %v1704, %v1706
  %v1712 = vsel %vm817, %v1708, %v1710
  %v1715 = vsel %vm817, %v1706, 0.0
  %v1716 = vsel %vm817, %v1710, 0.0
  %v1719 = vcombine.low %v1711, %v1715
  %v1720 = vcombine.low %v1712, %v1716
  %v1723 = vmul.f32 %v1702, %v1719
  %v1724 = vmul.f32 %v1702, %v1720
  %v1725 = vadd.f32 %v1699, %v1723
  %v1726 = vadd.f32 %v1700, %v1724
  %v1729 = vcombine.high %v1725, %v1725
  %v1730 = vcombine.high %v1726, %v1726
  %v1733 = vsel %vm840, %v1725, 0.0
  %v1734 = vsel %vm840, %v1729, 0.0
  %v1735 = vadd.f32 %v1733, %v1734
  %v1736 = vsel %vm840, %v1726, 0.0
  %v1737 = vadd.f32 %v1735, %v1736
  %v1738 = vsel %vm840, %v1730, 0.0
  %v1739 = vadd.f32 %v1737, %v1738
  %1740 = vadd.xlane.f32.xlu0 %v1739
  %v1741 = vpop.xlane.xlu0 %1740
  %v1742 = vmul.f32 %v1725, %v1725
  %v1743 = vmul.f32 %v1726, %v1726
  %v1746 = vcombine.high %v1742, %v1742
  %v1747 = vcombine.high %v1743, %v1743
  %v1750 = vsel %vm840, %v1742, 0.0
  %v1751 = vsel %vm840, %v1746, 0.0
  %v1752 = vadd.f32 %v1750, %v1751
  %v1753 = vsel %vm840, %v1743, 0.0
  %v1754 = vadd.f32 %v1752, %v1753
  %v1755 = vsel %vm840, %v1747, 0.0
  %v1756 = vadd.f32 %v1754, %v1755
  %1757 = vadd.xlane.f32.xlu0 %v1756
  %v1758 = vpop.xlane.xlu0 %1757
  %v1759 = vmul.f32 %v1741, 0.001953125
  %v1760 = vmul.f32 %v1758, 0.001953125
  %v1761 = vmul.f32 %v1759, %v1759
  %v1762 = vsub.f32 %v1760, %v1761
  %v1763 = vmax.f32 %v1762, 0.0
  %s1764 = scalar_lea.vmem %s3, 16
  %v1765 = vld [vmem:[%s1764] sm:$0xf]
  %s1766 = scalar_lea.vmem %s3, 24
  %v1767 = vld [vmem:[%s1766] sm:$0xf]
  %s1768 = scalar_lea.vmem %s3, 28
  %v1769 = vld [vmem:[%s1768] sm:$0xf]
  %v1770 = vmul.f32 %v1765, %v1767
  %v1771 = vmul.f32 %v1765, %v1765
  %v1772 = vmul.f32 %v1771, %v1763
  %v1773 = vadd.f32 %v1772, 1e-05
  %v1774 = vrsqrt.pop %v1773
  %v1775 = vmul.f32 %v1770, %v1774
  %v1776 = vmul.f32 %v1775, %v1759
  %v1777 = vsub.f32 %v1769, %v1776
  %1779 = vset.pattern.permute.xlu0 0
  %1780 = vperm.xlu0 %1779, %v1775
  %v1781 = vpop.permute.xlu0 %1780
  %v1783 = vunpack.c.l.s4 839922192
  %v1784 = vunpack.c.0.s8 %v1783
  %v1785 = vlaneseq
  %v1786 = vshrl.u32 %v1785, 7
  %v1787 = vsub.s32 %v1784, %v1786
  %v1788 = vrot.slane %v1781, %v1787
  %v1790 = vmul.f32 %v1725, %v1788
  %v1791 = vmul.f32 %v1726, %v1788
  %1793 = vset.pattern.permute.xlu0 0
  %1794 = vperm.xlu0 %1793, %v1777
  %v1795 = vpop.permute.xlu0 %1794
  %v1797 = vunpack.c.l.s4 839922192
  %v1798 = vunpack.c.0.s8 %v1797
  %v1799 = vlaneseq
  %v1800 = vshrl.u32 %v1799, 7
  %v1801 = vsub.s32 %v1798, %v1800
  %v1802 = vrot.slane %v1795, %v1801
  %v1804 = vadd.f32 %v1790, %v1802
  %v1805 = vadd.f32 %v1791, %v1802
  %v1806 = vadd.f32 %v1804, %v17
  %v1807 = vadd.f32 %v1805, %v18
  %v1808 = vmul.f32 %v1806, 0.01
  %v1809 = vmul.f32 %v1807, 0.01
  %v1810 = vmax.f32 %v1806, %v1808
  %v1811 = vmax.f32 %v1807, %v1809
  %1812 = vst [vmem:[%s4] sm:$0xff] %v1810
  %1813 = vst [vmem:[%s4 + $0x8] sm:$0xff] %v1811
  // Predicated region
  $region18: #{residual_block.1} parent=0 // pred_check
    _
  $region19: #{residual_block.1} parent=0 // pred_check_branch
    %1815 = sbr.rel (0) target = $region21
  $region20: #{residual_block.1} parent=0 // pred_region
    _
  $region21: #{residual_block.1} parent=0 // pred_fallthru
    _
  // Predicated region
  $region22: #{residual_block.1} parent=0 // pred_check
    _
  $region23: #{residual_block.1} parent=0 // pred_check_branch
    %1817 = sbr.rel (0) target = $region25
  $region24: #{residual_block.1} parent=0 // pred_region
    _
  $region25: #{residual_block.1} parent=0 // pred_fallthru
    _

</llo_original>
